<compile_context>
chip_gen: v7x
topology: tpu7x:2x2x1
jax: 0.10.0
libtpu: 0.0.40
codegen_flags: <defaults>
</compile_context>

<pallas_src>
import functools

import jax
import jax.numpy as jnp
from jax import lax
from jax.experimental import pallas as pl
from jax.experimental.pallas import tpu as pltpu


# ----------------------------------------------------------------------------
# Fused whole-network kernel (one grid step = IPB batch elements).
# ----------------------------------------------------------------------------
def _resnet_fused_kernel(x_ref, w_in_ref, b_in_ref, w1_ref, b1_ref,
                         w2_ref, b2_ref, w_out_ref, b_out_ref,
                         o_ref, pad_ref,
                         *, K, H, W, F, NB, IPB, TAPS_PER_PUSH):
    pad = (K - 1) // 2
    Wp = W + 2 * pad
    B = H * Wp                        # padded-pitch spatial width (lane axis)
    OFF = pad * Wp + pad              # flat index of pixel (0,0) inside pad buf
    taps = [(dy, dx) for dy in range(K) for dx in range(K)]
    n_taps = K * K

    # Lane-validity mask: padded-pitch columns x in [W, Wp) carry junk values
    # and must be zeroed before an activation is staged as conv input.
    lane = lax.broadcasted_iota(jnp.int32, (1, B), 1)
    col_ok = (lane % Wp) < W                                   # (1, B) bool

    # Zero the padded-activation scratch.  The interior [OFF, OFF+B) is fully
    # rewritten by every conv; the halo must be zero.  Zeroing is 4 dense
    # bf16 vector stores here, and doing it every step keeps the kernel
    # correct under megacore (each core has its own scratch instance).
    pad_ref[...] = jnp.zeros_like(pad_ref)

    def conv_taps(load_slab, w_mat, bias):
        # load_slab(s) -> (F, B) bf16 window of the zero-padded activation at
        # flat lane offset s.  w_mat: (F_out, K*K*F) bf16, columns (dy, dx, c).
        acc = jnp.zeros((w_mat.shape[0], B), jnp.float32)
        for t0 in range(0, n_taps, TAPS_PER_PUSH):
            group = taps[t0:t0 + TAPS_PER_PUSH]
            slabs = [load_slab(dy * Wp + dx) for dy, dx in group]
            patch = slabs[0] if len(slabs) == 1 else jnp.concatenate(slabs, 0)
            w_g = w_mat[:, t0 * F:(t0 + len(group)) * F]
            acc = acc + jnp.dot(w_g, patch,
                                preferred_element_type=jnp.float32)
        return acc + bias                                      # (F_out, B) f32

    def conv_same(act, w_mat, bias, apply_relu):
        # ReLU in f32, zero the junk pitch columns, cast to bf16 and stage
        # into the zero-bordered scratch, then run the grouped im2col matmuls.
        a = jnp.maximum(act, 0.0) if apply_relu else act
        a = jnp.where(col_ok, a, 0.0).astype(jnp.bfloat16)
        pad_ref[:, pl.ds(OFF, B)] = a
        return conv_taps(lambda s: pad_ref[:, pl.ds(s, B)], w_mat, bias)

    for img in range(IPB):                                     # images / step
        # --- input conv: x_ref already holds the padded-pitch bf16 image ---
        h = conv_taps(lambda s, _i=img: x_ref[_i, :, pl.ds(s, B)],
                      w_in_ref[...], b_in_ref[...])            # (F, B) f32

        # --- residual blocks: h = h + conv2(relu(conv1(relu(h)))) ---
        def block_body(i, hc):
            t = conv_same(hc, w1_ref[i], b1_ref[i], apply_relu=True)
            return hc + conv_same(t, w2_ref[i], b2_ref[i], apply_relu=True)

        if NB > 0:
            h = lax.fori_loop(0, NB, block_body, h)

        # --- 1x1 output conv: (Cout, F) @ (F, B) -> lane-dense (Cout, B) ---
        logits = jnp.dot(w_out_ref[...], h.astype(jnp.bfloat16),
                         preferred_element_type=jnp.float32)
        o_ref[img] = logits + b_out_ref[...]


# ----------------------------------------------------------------------------
# Wrapper: layout prep + single pallas_call for the whole forward pass.
# ----------------------------------------------------------------------------
def resnet_con_forward(x_nchw, params, img_size, num_colors,
                       taps_per_push=None, images_per_step=None):
    num_channels = img_size[0] - 1
    _, H, W = img_size
    N = x_nchw.shape[0]

    w_in, b_in = params["conv_in"]                 # (K, K, C_in, F), (F,)
    K, _, C_in, F = w_in.shape
    blocks = params["blocks"]
    NB = len(blocks)
    w_out, b_out = params["conv_out"]              # (1, 1, F, Cout), (Cout,)
    Cout = w_out.shape[-1]
    pad = (K - 1) // 2
    Wp, Hp = W + 2 * pad, H + 2 * pad
    B = H * Wp

    assert C_in <= F, "kernel assumes (num_channels + 1) <= num_filters"

    n_taps = K * K
    if taps_per_push is None:
        # ~256-deep contraction per MXU push: fills the v6e/v7x MXU in 2
        # pushes per 5x5 conv; on v5e this still lowers to full 128-deep
        # passes (same pass count as depth-80 groups, fewer result pops).
        taps_per_push = max(1, min(n_taps, 256 // F))

    if images_per_step is None:
        images_per_step = 1
        for cand in (4, 3, 2):          # amortize per-step overhead, but keep
            if N % cand == 0 and N // cand >= 2:   # grid >= 2 for megacore
                images_per_step = cand
                break
    assert N % images_per_step == 0, "batch must divide images_per_step"
    IPB = images_per_step

    # ---- weight / bias layout prep (tiny, once under jit) ----
    def prep_w(w_hwio):                            # -> (F_out, K*K*F) bf16
        k, _, cin, fout = w_hwio.shape
        if cin < F:
            w_hwio = jnp.pad(w_hwio, ((0, 0), (0, 0), (0, F - cin), (0, 0)))
        w = jnp.transpose(w_hwio, (3, 0, 1, 2)).reshape(fout, k * k * F)
        return w.astype(jnp.bfloat16)

    w_in_p = prep_w(w_in)
    b_in_p = b_in.reshape(F, 1).astype(jnp.float32)
    if NB > 0:
        w1s = jnp.stack([prep_w(blk[0]) for blk in blocks])
        b1s = jnp.stack([blk[1] for blk in blocks]).reshape(NB, F, 1)
        w2s = jnp.stack([prep_w(blk[2]) for blk in blocks])
        b2s = jnp.stack([blk[3] for blk in blocks]).reshape(NB, F, 1)
    else:                                          # depth == 2 (no blocks)
        w1s = jnp.zeros((1, F, K * K * F), jnp.bfloat16)
        b1s = jnp.zeros((1, F, 1), jnp.float32)
        w2s, b2s = w1s, b1s
    b1s = b1s.astype(jnp.float32)
    b2s = b2s.astype(jnp.float32)
    n_blk = w1s.shape[0]
    w_out_p = jnp.transpose(w_out.reshape(F, Cout)).astype(jnp.bfloat16)
    b_out_p = b_out.reshape(Cout, 1).astype(jnp.float32)

    # ---- input prep: pad channels to F, embed into the zero-bordered
    #      padded-pitch flat layout, tail-pad lanes to LPAD, cast to bf16 ----
    needed = B + (K - 1) * (Wp + 1)     # one past the last lane any tap reads
    LPAD = max(Hp * Wp, needed)
    LPAD = ((LPAD + 127) // 128) * 128
    xp = jnp.zeros((N, F, Hp, Wp), jnp.float32)
    xp = xp.at[:, :C_in, pad:pad + H, pad:pad + W].set(
        x_nchw.astype(jnp.float32))
    x_flat = jnp.pad(xp.reshape(N, F, Hp * Wp),
                     ((0, 0), (0, 0), (0, LPAD - Hp * Wp))).astype(jnp.bfloat16)

    kernel = functools.partial(_resnet_fused_kernel, K=K, H=H, W=W, F=F,
                               NB=NB, IPB=IPB, TAPS_PER_PUSH=taps_per_push)

    out = pl.pallas_call(
        kernel,
        out_shape=jax.ShapeDtypeStruct((N, Cout, B), jnp.float32),
        grid=(N // IPB,),
        in_specs=[
            pl.BlockSpec((IPB, F, LPAD), lambda n: (n, 0, 0)),
            pl.BlockSpec((F, K * K * F), lambda n: (0, 0)),
            pl.BlockSpec((F, 1), lambda n: (0, 0)),
            pl.BlockSpec((n_blk, F, K * K * F), lambda n: (0, 0, 0)),
            pl.BlockSpec((n_blk, F, 1), lambda n: (0, 0, 0)),
            pl.BlockSpec((n_blk, F, K * K * F), lambda n: (0, 0, 0)),
            pl.BlockSpec((n_blk, F, 1), lambda n: (0, 0, 0)),
            pl.BlockSpec((Cout, F), lambda n: (0, 0)),
            pl.BlockSpec((Cout, 1), lambda n: (0, 0)),
        ],
        out_specs=pl.BlockSpec((IPB, Cout, B), lambda n: (n, 0, 0)),
        scratch_shapes=[pltpu.VMEM((F, LPAD), jnp.bfloat16)],
        compiler_params=pltpu.CompilerParams(
            dimension_semantics=("parallel",)),
    )(x_flat, w_in_p, b_in_p, w1s, b1s, w2s, b2s, w_out_p, b_out_p)

    # Drop the junk pitch columns; channel dim is already colors-major NCHW,
    # so the PyTorch .view(-1, num_colors, num_channels, H, W) is a reshape.
    out = out.reshape(N, Cout, H, Wp)[:, :, :, :W]
    return out.reshape(N, num_colors, num_channels, H, W)


# ----------------------------------------------------------------------------
# Parameter init (deterministic, mimics PyTorch Conv2d default uniform init).
# ----------------------------------------------------------------------------
def _init_conv(key, K, cin, cout):
    kw, kb = jax.random.split(key)
    bound = 1.0 / jnp.sqrt(float(K * K * cin))
    w = jax.random.uniform(kw, (K, K, cin, cout), jnp.float32, -bound, bound)
    b = jax.random.uniform(kb, (cout,), jnp.float32, -bound, bound)
    return w, b


def init_params(key, img_size, num_colors, num_filters, depth, filter_size):
    num_channels = img_size[0] - 1
    keys = jax.random.split(key, 2 * (depth - 2) + 2)
    params = {}
    params["conv_in"] = _init_conv(keys[0], filter_size, num_channels + 1,
                                   num_filters)
    blocks = []
    for i in range(depth - 2):
        w1, b1 = _init_conv(keys[1 + 2 * i], filter_size, num_filters,
                            num_filters)
        w2, b2 = _init_conv(keys[2 + 2 * i], filter_size, num_filters,
                            num_filters)
        blocks.append((w1, b1, w2, b2))
    params["blocks"] = blocks
    params["conv_out"] = _init_conv(keys[-1], 1, num_filters,
                                    num_colors * num_channels)
    return params


# ----------------------------------------------------------------------------
# Pure-JAX reference (mirrors the kernel numerics: bf16 operands, f32 accum).
# ----------------------------------------------------------------------------
def _conv_ref(x, w, b, relu_input):
    if relu_input:
        x = jnp.maximum(x, 0.0)
    pad = (w.shape[0] - 1) // 2
    out = lax.conv_general_dilated(
        x.astype(jnp.bfloat16), w.astype(jnp.bfloat16),
        window_strides=(1, 1), padding=[(pad, pad), (pad, pad)],
        dimension_numbers=("NHWC", "HWIO", "NHWC"),
        preferred_element_type=jnp.float32)
    return out + b.reshape(1, 1, 1, -1)


def resnet_con_forward_ref(x_nchw, params, img_size, num_colors):
    num_channels = img_size[0] - 1
    _, H, W = img_size
    x = jnp.transpose(x_nchw, (0, 2, 3, 1))
    w, b = params["conv_in"]
    h = _conv_ref(x, w, b, False)
    for (w1, b1, w2, b2) in params["blocks"]:
        t = _conv_ref(h, w1, b1, True)
        h = h + _conv_ref(t, w2, b2, True)
    w, b = params["conv_out"]
    logits = _conv_ref(h, w, b, False)
    logits_nchw = jnp.transpose(logits, (0, 3, 1, 2))
    N = logits_nchw.shape[0]
    return logits_nchw.reshape(N, num_colors, num_channels, H, W)


if __name__ == "__main__":
    # Small config consistent with the module: img_size = (num_channels+1,H,W)
    img_size = (4, 16, 16)          # 3 image channels + 1 mask channel
    num_colors = 8
    num_filters = 16
    depth = 4                       # input conv, 2 residual blocks, 1x1 output
    filter_size = 5
    batch = 2

    key = jax.random.PRNGKey(0)
    k_x, k_p = jax.random.split(key)
    x = jax.random.normal(k_x, (batch,) + img_size, jnp.float32)   # NCHW input
    params = init_params(k_p, img_size, num_colors, num_filters, depth,
                         filter_size)

    fwd = jax.jit(functools.partial(resnet_con_forward, img_size=img_size,
                                    num_colors=num_colors))
    out = jax.block_until_ready(fwd(x, params))

    expected_shape = (batch, num_colors, img_size[0] - 1, img_size[1],
                      img_size[2])
    assert out.shape == expected_shape, (out.shape, expected_shape)

    ref = resnet_con_forward_ref(x, params, img_size, num_colors)
    err = float(jnp.max(jnp.abs(out - ref)))
    scale = float(jnp.max(jnp.abs(ref))) + 1.0
    if err > 3e-3 * scale:
        raise AssertionError(f"mismatch vs reference: max abs err {err}")

    print("KERNEL_OK")
</pallas_src>

<mosaic_0001>
module attributes {stable_mosaic.version = 11 : i64} {
  func.func @_resnet_fused_kernel(%arg0: i32, %arg1: memref<1x16x512xbf16, #tpu.memory_space<vmem>>, %arg2: memref<16x400xbf16, #tpu.memory_space<vmem>>, %arg3: memref<16x1xf32, #tpu.memory_space<vmem>>, %arg4: memref<2x16x400xbf16, #tpu.memory_space<vmem>>, %arg5: memref<2x16x1xf32, #tpu.memory_space<vmem>>, %arg6: memref<2x16x400xbf16, #tpu.memory_space<vmem>>, %arg7: memref<2x16x1xf32, #tpu.memory_space<vmem>>, %arg8: memref<24x16xbf16, #tpu.memory_space<vmem>>, %arg9: memref<24x1xf32, #tpu.memory_space<vmem>>, %arg10: memref<1x24x320xf32, #tpu.memory_space<vmem>>, %arg11: memref<16x512xbf16, #tpu.memory_space<vmem>>) attributes {dimension_semantics = [#tpu.dimension_semantics<parallel>], iteration_bounds = array<i64: 2>, scalar_prefetch = 0 : i64, scratch_operands = 1 : i64, tpu.core_type = #tpu.core_type<tc>, window_params = [{transform_indices = @transform_0, window_bounds = array<i64: 1, 16, 512>}, {pipeline_mode = #tpu.pipeline_mode<synchronous>, transform_indices = @transform_1, window_bounds = array<i64: 16, 400>}, {pipeline_mode = #tpu.pipeline_mode<synchronous>, transform_indices = @transform_2, window_bounds = array<i64: 16, 1>}, {pipeline_mode = #tpu.pipeline_mode<synchronous>, transform_indices = @transform_3, window_bounds = array<i64: 2, 16, 400>}, {pipeline_mode = #tpu.pipeline_mode<synchronous>, transform_indices = @transform_4, window_bounds = array<i64: 2, 16, 1>}, {pipeline_mode = #tpu.pipeline_mode<synchronous>, transform_indices = @transform_5, window_bounds = array<i64: 2, 16, 400>}, {pipeline_mode = #tpu.pipeline_mode<synchronous>, transform_indices = @transform_6, window_bounds = array<i64: 2, 16, 1>}, {pipeline_mode = #tpu.pipeline_mode<synchronous>, transform_indices = @transform_7, window_bounds = array<i64: 24, 16>}, {pipeline_mode = #tpu.pipeline_mode<synchronous>, transform_indices = @transform_8, window_bounds = array<i64: 24, 1>}, {transform_indices = @transform_9, window_bounds = array<i64: 1, 24, 320>}]} {
    %0 = tpu.iota {dimensions = array<i32: 1>} : vector<1x320xi32>
    %c20_i32 = arith.constant 20 : i32
    %c0_i32 = arith.constant 0 : i32
    %1 = arith.cmpi eq, %c20_i32, %c0_i32 : i32
    %c1_i32 = arith.constant 1 : i32
    %2 = arith.select %1, %c1_i32, %c20_i32 : i32
    %3 = vector.broadcast %2 : i32 to vector<1x320xi32>
    %4 = arith.remsi %0, %3 : vector<1x320xi32>
    %c0_i32_0 = arith.constant 0 : i32
    %5 = vector.broadcast %c0_i32_0 : i32 to vector<1x320xi32>
    %6 = arith.cmpi ne, %4, %5 : vector<1x320xi32>
    %c0_i32_1 = arith.constant 0 : i32
    %7 = vector.broadcast %c0_i32_1 : i32 to vector<1x320xi32>
    %8 = arith.cmpi slt, %4, %7 : vector<1x320xi32>
    %c0_i32_2 = arith.constant 0 : i32
    %9 = arith.cmpi slt, %2, %c0_i32_2 : i32
    %10 = vector.broadcast %9 : i1 to vector<1x320xi1>
    %11 = vector.broadcast %10 : vector<1x320xi1> to vector<1x320xi1>
    %12 = arith.xori %8, %11 : vector<1x320xi1>
    %13 = arith.andi %12, %6 : vector<1x320xi1>
    %14 = vector.broadcast %2 : i32 to vector<1x320xi32>
    %15 = arith.addi %4, %14 : vector<1x320xi32>
    %16 = arith.select %13, %15, %4 : vector<1x320xi1>, vector<1x320xi32>
    %c16_i32 = arith.constant 16 : i32
    %17 = vector.broadcast %c16_i32 : i32 to vector<1x320xi32>
    %18 = arith.cmpi slt, %16, %17 : vector<1x320xi32>
    %cst = arith.constant 0.000000e+00 : bf16
    %19 = vector.broadcast %cst : bf16 to vector<16x512xbf16>
    %c0 = arith.constant 0 : index
    %c0_3 = arith.constant 0 : index
    %20 = vector.load %arg11[%c0, %c0_3] : memref<16x512xbf16, #tpu.memory_space<vmem>>, vector<16x512xbf16>
    tpu.vector_store %arg11[%c0, %c0_3], %19 {strides = array<i32>} : memref<16x512xbf16, #tpu.memory_space<vmem>>, vector<16x512xbf16>,
    %c0_4 = arith.constant 0 : index
    %c0_5 = arith.constant 0 : index
    %21 = vector.load %arg2[%c0_4, %c0_5] : memref<16x400xbf16, #tpu.memory_space<vmem>>, vector<16x400xbf16>
    %c0_6 = arith.constant 0 : index
    %c0_7 = arith.constant 0 : index
    %22 = vector.load %arg3[%c0_6, %c0_7] : memref<16x1xf32, #tpu.memory_space<vmem>>, vector<16x1xf32>
    %cst_8 = arith.constant 0.000000e+00 : f32
    %23 = vector.broadcast %cst_8 : f32 to vector<16x320xf32>
    %c0_9 = arith.constant 0 : index
    %c0_10 = arith.constant 0 : index
    %c0_11 = arith.constant 0 : index
    %24 = vector.load %arg1[%c0_9, %c0_10, %c0_11] : memref<1x16x512xbf16, #tpu.memory_space<vmem>>, vector<1x16x320xbf16>
    %25 = vector.shape_cast %24 : vector<1x16x320xbf16> to vector<16x320xbf16>
    %c0_12 = arith.constant 0 : index
    %c0_13 = arith.constant 0 : index
    %c1 = arith.constant 1 : index
    %26 = vector.load %arg1[%c0_12, %c0_13, %c1] : memref<1x16x512xbf16, #tpu.memory_space<vmem>>, vector<1x16x320xbf16>
    %27 = vector.shape_cast %26 : vector<1x16x320xbf16> to vector<16x320xbf16>
    %c0_14 = arith.constant 0 : index
    %c0_15 = arith.constant 0 : index
    %c2 = arith.constant 2 : index
    %28 = vector.load %arg1[%c0_14, %c0_15, %c2] : memref<1x16x512xbf16, #tpu.memory_space<vmem>>, vector<1x16x320xbf16>
    %29 = vector.shape_cast %28 : vector<1x16x320xbf16> to vector<16x320xbf16>
    %c0_16 = arith.constant 0 : index
    %c0_17 = arith.constant 0 : index
    %c3 = arith.constant 3 : index
    %30 = vector.load %arg1[%c0_16, %c0_17, %c3] : memref<1x16x512xbf16, #tpu.memory_space<vmem>>, vector<1x16x320xbf16>
    %31 = vector.shape_cast %30 : vector<1x16x320xbf16> to vector<16x320xbf16>
    %c0_18 = arith.constant 0 : index
    %c0_19 = arith.constant 0 : index
    %c4 = arith.constant 4 : index
    %32 = vector.load %arg1[%c0_18, %c0_19, %c4] : memref<1x16x512xbf16, #tpu.memory_space<vmem>>, vector<1x16x320xbf16>
    %33 = vector.shape_cast %32 : vector<1x16x320xbf16> to vector<16x320xbf16>
    %c0_20 = arith.constant 0 : index
    %c0_21 = arith.constant 0 : index
    %c20 = arith.constant 20 : index
    %34 = vector.load %arg1[%c0_20, %c0_21, %c20] : memref<1x16x512xbf16, #tpu.memory_space<vmem>>, vector<1x16x320xbf16>
    %35 = vector.shape_cast %34 : vector<1x16x320xbf16> to vector<16x320xbf16>
    %c0_22 = arith.constant 0 : index
    %c0_23 = arith.constant 0 : index
    %c21 = arith.constant 21 : index
    %36 = vector.load %arg1[%c0_22, %c0_23, %c21] : memref<1x16x512xbf16, #tpu.memory_space<vmem>>, vector<1x16x320xbf16>
    %37 = vector.shape_cast %36 : vector<1x16x320xbf16> to vector<16x320xbf16>
    %c0_24 = arith.constant 0 : index
    %c0_25 = arith.constant 0 : index
    %c22 = arith.constant 22 : index
    %38 = vector.load %arg1[%c0_24, %c0_25, %c22] : memref<1x16x512xbf16, #tpu.memory_space<vmem>>, vector<1x16x320xbf16>
    %39 = vector.shape_cast %38 : vector<1x16x320xbf16> to vector<16x320xbf16>
    %c0_26 = arith.constant 0 : index
    %c0_27 = arith.constant 0 : index
    %c23 = arith.constant 23 : index
    %40 = vector.load %arg1[%c0_26, %c0_27, %c23] : memref<1x16x512xbf16, #tpu.memory_space<vmem>>, vector<1x16x320xbf16>
    %41 = vector.shape_cast %40 : vector<1x16x320xbf16> to vector<16x320xbf16>
    %c0_28 = arith.constant 0 : index
    %c0_29 = arith.constant 0 : index
    %c24 = arith.constant 24 : index
    %42 = vector.load %arg1[%c0_28, %c0_29, %c24] : memref<1x16x512xbf16, #tpu.memory_space<vmem>>, vector<1x16x320xbf16>
    %43 = vector.shape_cast %42 : vector<1x16x320xbf16> to vector<16x320xbf16>
    %c0_30 = arith.constant 0 : index
    %c0_31 = arith.constant 0 : index
    %c40 = arith.constant 40 : index
    %44 = vector.load %arg1[%c0_30, %c0_31, %c40] : memref<1x16x512xbf16, #tpu.memory_space<vmem>>, vector<1x16x320xbf16>
    %45 = vector.shape_cast %44 : vector<1x16x320xbf16> to vector<16x320xbf16>
    %c0_32 = arith.constant 0 : index
    %c0_33 = arith.constant 0 : index
    %c41 = arith.constant 41 : index
    %46 = vector.load %arg1[%c0_32, %c0_33, %c41] : memref<1x16x512xbf16, #tpu.memory_space<vmem>>, vector<1x16x320xbf16>
    %47 = vector.shape_cast %46 : vector<1x16x320xbf16> to vector<16x320xbf16>
    %c0_34 = arith.constant 0 : index
    %c0_35 = arith.constant 0 : index
    %c42 = arith.constant 42 : index
    %48 = vector.load %arg1[%c0_34, %c0_35, %c42] : memref<1x16x512xbf16, #tpu.memory_space<vmem>>, vector<1x16x320xbf16>
    %49 = vector.shape_cast %48 : vector<1x16x320xbf16> to vector<16x320xbf16>
    %c0_36 = arith.constant 0 : index
    %c0_37 = arith.constant 0 : index
    %c43 = arith.constant 43 : index
    %50 = vector.load %arg1[%c0_36, %c0_37, %c43] : memref<1x16x512xbf16, #tpu.memory_space<vmem>>, vector<1x16x320xbf16>
    %51 = vector.shape_cast %50 : vector<1x16x320xbf16> to vector<16x320xbf16>
    %c0_38 = arith.constant 0 : index
    %c0_39 = arith.constant 0 : index
    %c44 = arith.constant 44 : index
    %52 = vector.load %arg1[%c0_38, %c0_39, %c44] : memref<1x16x512xbf16, #tpu.memory_space<vmem>>, vector<1x16x320xbf16>
    %53 = vector.shape_cast %52 : vector<1x16x320xbf16> to vector<16x320xbf16>
    %c0_40 = arith.constant 0 : index
    %c0_41 = arith.constant 0 : index
    %c60 = arith.constant 60 : index
    %54 = vector.load %arg1[%c0_40, %c0_41, %c60] : memref<1x16x512xbf16, #tpu.memory_space<vmem>>, vector<1x16x320xbf16>
    %55 = vector.shape_cast %54 : vector<1x16x320xbf16> to vector<16x320xbf16>
    %56 = tpu.concatenate %25, %27, %29, %31, %33, %35, %37, %39, %41, %43, %45, %47, %49, %51, %53, %55 in 0 : vector<16x320xbf16>, vector<16x320xbf16>, vector<16x320xbf16>, vector<16x320xbf16>, vector<16x320xbf16>, vector<16x320xbf16>, vector<16x320xbf16>, vector<16x320xbf16>, vector<16x320xbf16>, vector<16x320xbf16>, vector<16x320xbf16>, vector<16x320xbf16>, vector<16x320xbf16>, vector<16x320xbf16>, vector<16x320xbf16>, vector<16x320xbf16> -> vector<256x320xbf16>
    %57 = vector.extract_strided_slice %21 {offsets = [0, 0], sizes = [16, 256], strides = [1, 1]} : vector<16x400xbf16> to vector<16x256xbf16>
    %cst_42 = arith.constant dense<0.000000e+00> : vector<16x320xf32>
    %58 = tpu.matmul %57, %56, %cst_42 {dimension_numbers = #tpu.dot_dimension_numbers<[1], [0], [0], [1], [0, 0, 1, 1], [], []>} : vector<16x256xbf16>, vector<256x320xbf16>, vector<16x320xf32> -> vector<16x320xf32>
    %59 = arith.addf %23, %58 : vector<16x320xf32>
    %c0_43 = arith.constant 0 : index
    %c0_44 = arith.constant 0 : index
    %c61 = arith.constant 61 : index
    %60 = vector.load %arg1[%c0_43, %c0_44, %c61] : memref<1x16x512xbf16, #tpu.memory_space<vmem>>, vector<1x16x320xbf16>
    %61 = vector.shape_cast %60 : vector<1x16x320xbf16> to vector<16x320xbf16>
    %c0_45 = arith.constant 0 : index
    %c0_46 = arith.constant 0 : index
    %c62 = arith.constant 62 : index
    %62 = vector.load %arg1[%c0_45, %c0_46, %c62] : memref<1x16x512xbf16, #tpu.memory_space<vmem>>, vector<1x16x320xbf16>
    %63 = vector.shape_cast %62 : vector<1x16x320xbf16> to vector<16x320xbf16>
    %c0_47 = arith.constant 0 : index
    %c0_48 = arith.constant 0 : index
    %c63 = arith.constant 63 : index
    %64 = vector.load %arg1[%c0_47, %c0_48, %c63] : memref<1x16x512xbf16, #tpu.memory_space<vmem>>, vector<1x16x320xbf16>
    %65 = vector.shape_cast %64 : vector<1x16x320xbf16> to vector<16x320xbf16>
    %c0_49 = arith.constant 0 : index
    %c0_50 = arith.constant 0 : index
    %c64 = arith.constant 64 : index
    %66 = vector.load %arg1[%c0_49, %c0_50, %c64] : memref<1x16x512xbf16, #tpu.memory_space<vmem>>, vector<1x16x320xbf16>
    %67 = vector.shape_cast %66 : vector<1x16x320xbf16> to vector<16x320xbf16>
    %c0_51 = arith.constant 0 : index
    %c0_52 = arith.constant 0 : index
    %c80 = arith.constant 80 : index
    %68 = vector.load %arg1[%c0_51, %c0_52, %c80] : memref<1x16x512xbf16, #tpu.memory_space<vmem>>, vector<1x16x320xbf16>
    %69 = vector.shape_cast %68 : vector<1x16x320xbf16> to vector<16x320xbf16>
    %c0_53 = arith.constant 0 : index
    %c0_54 = arith.constant 0 : index
    %c81 = arith.constant 81 : index
    %70 = vector.load %arg1[%c0_53, %c0_54, %c81] : memref<1x16x512xbf16, #tpu.memory_space<vmem>>, vector<1x16x320xbf16>
    %71 = vector.shape_cast %70 : vector<1x16x320xbf16> to vector<16x320xbf16>
    %c0_55 = arith.constant 0 : index
    %c0_56 = arith.constant 0 : index
    %c82 = arith.constant 82 : index
    %72 = vector.load %arg1[%c0_55, %c0_56, %c82] : memref<1x16x512xbf16, #tpu.memory_space<vmem>>, vector<1x16x320xbf16>
    %73 = vector.shape_cast %72 : vector<1x16x320xbf16> to vector<16x320xbf16>
    %c0_57 = arith.constant 0 : index
    %c0_58 = arith.constant 0 : index
    %c83 = arith.constant 83 : index
    %74 = vector.load %arg1[%c0_57, %c0_58, %c83] : memref<1x16x512xbf16, #tpu.memory_space<vmem>>, vector<1x16x320xbf16>
    %75 = vector.shape_cast %74 : vector<1x16x320xbf16> to vector<16x320xbf16>
    %c0_59 = arith.constant 0 : index
    %c0_60 = arith.constant 0 : index
    %c84 = arith.constant 84 : index
    %76 = vector.load %arg1[%c0_59, %c0_60, %c84] : memref<1x16x512xbf16, #tpu.memory_space<vmem>>, vector<1x16x320xbf16>
    %77 = vector.shape_cast %76 : vector<1x16x320xbf16> to vector<16x320xbf16>
    %78 = tpu.concatenate %61, %63, %65, %67, %69, %71, %73, %75, %77 in 0 : vector<16x320xbf16>, vector<16x320xbf16>, vector<16x320xbf16>, vector<16x320xbf16>, vector<16x320xbf16>, vector<16x320xbf16>, vector<16x320xbf16>, vector<16x320xbf16>, vector<16x320xbf16> -> vector<144x320xbf16>
    %79 = vector.extract_strided_slice %21 {offsets = [0, 256], sizes = [16, 144], strides = [1, 1]} : vector<16x400xbf16> to vector<16x144xbf16>
    %cst_61 = arith.constant dense<0.000000e+00> : vector<16x320xf32>
    %80 = tpu.matmul %79, %78, %cst_61 {dimension_numbers = #tpu.dot_dimension_numbers<[1], [0], [0], [1], [0, 0, 1, 1], [], []>} : vector<16x144xbf16>, vector<144x320xbf16>, vector<16x320xf32> -> vector<16x320xf32>
    %81 = arith.addf %59, %80 : vector<16x320xf32>
    %82 = vector.broadcast %22 : vector<16x1xf32> to vector<16x320xf32>
    %83 = arith.addf %81, %82 : vector<16x320xf32>
    %c0_i32_62 = arith.constant 0 : i32
    %c2_i32 = arith.constant 2 : i32
    %84 = arith.addi %c0_i32_62, %c2_i32 : i32
    %c1_i32_63 = arith.constant 1 : i32
    %85 = scf.for %arg12 = %c0_i32_62 to %84 step %c1_i32_63 iter_args(%arg13 = %83) -> (vector<16x320xf32>)  : i32 {
      %95 = arith.index_cast %arg12 : i32 to index
      %c0_73 = arith.constant 0 : index
      %c0_74 = arith.constant 0 : index
      %96 = vector.load %arg4[%95, %c0_73, %c0_74] : memref<2x16x400xbf16, #tpu.memory_space<vmem>>, vector<1x16x400xbf16>
      %97 = vector.shape_cast %96 : vector<1x16x400xbf16> to vector<16x400xbf16>
      %98 = arith.index_cast %arg12 : i32 to index
      %c0_75 = arith.constant 0 : index
      %c0_76 = arith.constant 0 : index
      %99 = vector.load %arg5[%98, %c0_75, %c0_76] : memref<2x16x1xf32, #tpu.memory_space<vmem>>, vector<1x16x1xf32>
      %100 = vector.shape_cast %99 : vector<1x16x1xf32> to vector<16x1xf32>
      %cst_77 = arith.constant 0.000000e+00 : f32
      %101 = vector.broadcast %cst_77 : f32 to vector<16x320xf32>
      %102 = arith.maximumf %arg13, %101 : vector<16x320xf32>
      %cst_78 = arith.constant 0.000000e+00 : f32
      %103 = vector.shape_cast %18 : vector<1x320xi1> to vector<1x320xi1>
      %104 = vector.broadcast %103 : vector<1x320xi1> to vector<16x320xi1>
      %105 = vector.broadcast %cst_78 : f32 to vector<16x320xf32>
      %106 = arith.select %104, %102, %105 : vector<16x320xi1>, vector<16x320xf32>
      %107 = arith.truncf %106 : vector<16x320xf32> to vector<16x320xbf16>
      %c0_79 = arith.constant 0 : index
      %c42_80 = arith.constant 42 : index
      %108 = vector.load %arg11[%c0_79, %c42_80] : memref<16x512xbf16, #tpu.memory_space<vmem>>, vector<16x320xbf16>
      tpu.vector_store %arg11[%c0_79, %c42_80], %107 {strides = array<i32>} : memref<16x512xbf16, #tpu.memory_space<vmem>>, vector<16x320xbf16>,
      %cst_81 = arith.constant 0.000000e+00 : f32
      %109 = vector.broadcast %cst_81 : f32 to vector<16x320xf32>
      %c0_82 = arith.constant 0 : index
      %c0_83 = arith.constant 0 : index
      %110 = vector.load %arg11[%c0_82, %c0_83] : memref<16x512xbf16, #tpu.memory_space<vmem>>, vector<16x320xbf16>
      %c0_84 = arith.constant 0 : index
      %c1_85 = arith.constant 1 : index
      %111 = vector.load %arg11[%c0_84, %c1_85] : memref<16x512xbf16, #tpu.memory_space<vmem>>, vector<16x320xbf16>
      %c0_86 = arith.constant 0 : index
      %c2_87 = arith.constant 2 : index
      %112 = vector.load %arg11[%c0_86, %c2_87] : memref<16x512xbf16, #tpu.memory_space<vmem>>, vector<16x320xbf16>
      %c0_88 = arith.constant 0 : index
      %c3_89 = arith.constant 3 : index
      %113 = vector.load %arg11[%c0_88, %c3_89] : memref<16x512xbf16, #tpu.memory_space<vmem>>, vector<16x320xbf16>
      %c0_90 = arith.constant 0 : index
      %c4_91 = arith.constant 4 : index
      %114 = vector.load %arg11[%c0_90, %c4_91] : memref<16x512xbf16, #tpu.memory_space<vmem>>, vector<16x320xbf16>
      %c0_92 = arith.constant 0 : index
      %c20_93 = arith.constant 20 : index
      %115 = vector.load %arg11[%c0_92, %c20_93] : memref<16x512xbf16, #tpu.memory_space<vmem>>, vector<16x320xbf16>
      %c0_94 = arith.constant 0 : index
      %c21_95 = arith.constant 21 : index
      %116 = vector.load %arg11[%c0_94, %c21_95] : memref<16x512xbf16, #tpu.memory_space<vmem>>, vector<16x320xbf16>
      %c0_96 = arith.constant 0 : index
      %c22_97 = arith.constant 22 : index
      %117 = vector.load %arg11[%c0_96, %c22_97] : memref<16x512xbf16, #tpu.memory_space<vmem>>, vector<16x320xbf16>
      %c0_98 = arith.constant 0 : index
      %c23_99 = arith.constant 23 : index
      %118 = vector.load %arg11[%c0_98, %c23_99] : memref<16x512xbf16, #tpu.memory_space<vmem>>, vector<16x320xbf16>
      %c0_100 = arith.constant 0 : index
      %c24_101 = arith.constant 24 : index
      %119 = vector.load %arg11[%c0_100, %c24_101] : memref<16x512xbf16, #tpu.memory_space<vmem>>, vector<16x320xbf16>
      %c0_102 = arith.constant 0 : index
      %c40_103 = arith.constant 40 : index
      %120 = vector.load %arg11[%c0_102, %c40_103] : memref<16x512xbf16, #tpu.memory_space<vmem>>, vector<16x320xbf16>
      %c0_104 = arith.constant 0 : index
      %c41_105 = arith.constant 41 : index
      %121 = vector.load %arg11[%c0_104, %c41_105] : memref<16x512xbf16, #tpu.memory_space<vmem>>, vector<16x320xbf16>
      %c0_106 = arith.constant 0 : index
      %c42_107 = arith.constant 42 : index
      %122 = vector.load %arg11[%c0_106, %c42_107] : memref<16x512xbf16, #tpu.memory_space<vmem>>, vector<16x320xbf16>
      %c0_108 = arith.constant 0 : index
      %c43_109 = arith.constant 43 : index
      %123 = vector.load %arg11[%c0_108, %c43_109] : memref<16x512xbf16, #tpu.memory_space<vmem>>, vector<16x320xbf16>
      %c0_110 = arith.constant 0 : index
      %c44_111 = arith.constant 44 : index
      %124 = vector.load %arg11[%c0_110, %c44_111] : memref<16x512xbf16, #tpu.memory_space<vmem>>, vector<16x320xbf16>
      %c0_112 = arith.constant 0 : index
      %c60_113 = arith.constant 60 : index
      %125 = vector.load %arg11[%c0_112, %c60_113] : memref<16x512xbf16, #tpu.memory_space<vmem>>, vector<16x320xbf16>
      %126 = tpu.concatenate %110, %111, %112, %113, %114, %115, %116, %117, %118, %119, %120, %121, %122, %123, %124, %125 in 0 : vector<16x320xbf16>, vector<16x320xbf16>, vector<16x320xbf16>, vector<16x320xbf16>, vector<16x320xbf16>, vector<16x320xbf16>, vector<16x320xbf16>, vector<16x320xbf16>, vector<16x320xbf16>, vector<16x320xbf16>, vector<16x320xbf16>, vector<16x320xbf16>, vector<16x320xbf16>, vector<16x320xbf16>, vector<16x320xbf16>, vector<16x320xbf16> -> vector<256x320xbf16>
      %127 = vector.extract_strided_slice %97 {offsets = [0, 0], sizes = [16, 256], strides = [1, 1]} : vector<16x400xbf16> to vector<16x256xbf16>
      %cst_114 = arith.constant dense<0.000000e+00> : vector<16x320xf32>
      %128 = tpu.matmul %127, %126, %cst_114 {dimension_numbers = #tpu.dot_dimension_numbers<[1], [0], [0], [1], [0, 0, 1, 1], [], []>} : vector<16x256xbf16>, vector<256x320xbf16>, vector<16x320xf32> -> vector<16x320xf32>
      %129 = arith.addf %109, %128 : vector<16x320xf32>
      %c0_115 = arith.constant 0 : index
      %c61_116 = arith.constant 61 : index
      %130 = vector.load %arg11[%c0_115, %c61_116] : memref<16x512xbf16, #tpu.memory_space<vmem>>, vector<16x320xbf16>
      %c0_117 = arith.constant 0 : index
      %c62_118 = arith.constant 62 : index
      %131 = vector.load %arg11[%c0_117, %c62_118] : memref<16x512xbf16, #tpu.memory_space<vmem>>, vector<16x320xbf16>
      %c0_119 = arith.constant 0 : index
      %c63_120 = arith.constant 63 : index
      %132 = vector.load %arg11[%c0_119, %c63_120] : memref<16x512xbf16, #tpu.memory_space<vmem>>, vector<16x320xbf16>
      %c0_121 = arith.constant 0 : index
      %c64_122 = arith.constant 64 : index
      %133 = vector.load %arg11[%c0_121, %c64_122] : memref<16x512xbf16, #tpu.memory_space<vmem>>, vector<16x320xbf16>
      %c0_123 = arith.constant 0 : index
      %c80_124 = arith.constant 80 : index
      %134 = vector.load %arg11[%c0_123, %c80_124] : memref<16x512xbf16, #tpu.memory_space<vmem>>, vector<16x320xbf16>
      %c0_125 = arith.constant 0 : index
      %c81_126 = arith.constant 81 : index
      %135 = vector.load %arg11[%c0_125, %c81_126] : memref<16x512xbf16, #tpu.memory_space<vmem>>, vector<16x320xbf16>
      %c0_127 = arith.constant 0 : index
      %c82_128 = arith.constant 82 : index
      %136 = vector.load %arg11[%c0_127, %c82_128] : memref<16x512xbf16, #tpu.memory_space<vmem>>, vector<16x320xbf16>
      %c0_129 = arith.constant 0 : index
      %c83_130 = arith.constant 83 : index
      %137 = vector.load %arg11[%c0_129, %c83_130] : memref<16x512xbf16, #tpu.memory_space<vmem>>, vector<16x320xbf16>
      %c0_131 = arith.constant 0 : index
      %c84_132 = arith.constant 84 : index
      %138 = vector.load %arg11[%c0_131, %c84_132] : memref<16x512xbf16, #tpu.memory_space<vmem>>, vector<16x320xbf16>
      %139 = tpu.concatenate %130, %131, %132, %133, %134, %135, %136, %137, %138 in 0 : vector<16x320xbf16>, vector<16x320xbf16>, vector<16x320xbf16>, vector<16x320xbf16>, vector<16x320xbf16>, vector<16x320xbf16>, vector<16x320xbf16>, vector<16x320xbf16>, vector<16x320xbf16> -> vector<144x320xbf16>
      %140 = vector.extract_strided_slice %97 {offsets = [0, 256], sizes = [16, 144], strides = [1, 1]} : vector<16x400xbf16> to vector<16x144xbf16>
      %cst_133 = arith.constant dense<0.000000e+00> : vector<16x320xf32>
      %141 = tpu.matmul %140, %139, %cst_133 {dimension_numbers = #tpu.dot_dimension_numbers<[1], [0], [0], [1], [0, 0, 1, 1], [], []>} : vector<16x144xbf16>, vector<144x320xbf16>, vector<16x320xf32> -> vector<16x320xf32>
      %142 = arith.addf %129, %141 : vector<16x320xf32>
      %143 = vector.broadcast %100 : vector<16x1xf32> to vector<16x320xf32>
      %144 = arith.addf %142, %143 : vector<16x320xf32>
      %145 = arith.index_cast %arg12 : i32 to index
      %c0_134 = arith.constant 0 : index
      %c0_135 = arith.constant 0 : index
      %146 = vector.load %arg6[%145, %c0_134, %c0_135] : memref<2x16x400xbf16, #tpu.memory_space<vmem>>, vector<1x16x400xbf16>
      %147 = vector.shape_cast %146 : vector<1x16x400xbf16> to vector<16x400xbf16>
      %148 = arith.index_cast %arg12 : i32 to index
      %c0_136 = arith.constant 0 : index
      %c0_137 = arith.constant 0 : index
      %149 = vector.load %arg7[%148, %c0_136, %c0_137] : memref<2x16x1xf32, #tpu.memory_space<vmem>>, vector<1x16x1xf32>
      %150 = vector.shape_cast %149 : vector<1x16x1xf32> to vector<16x1xf32>
      %cst_138 = arith.constant 0.000000e+00 : f32
      %151 = vector.broadcast %cst_138 : f32 to vector<16x320xf32>
      %152 = arith.maximumf %144, %151 : vector<16x320xf32>
      %cst_139 = arith.constant 0.000000e+00 : f32
      %153 = vector.shape_cast %18 : vector<1x320xi1> to vector<1x320xi1>
      %154 = vector.broadcast %153 : vector<1x320xi1> to vector<16x320xi1>
      %155 = vector.broadcast %cst_139 : f32 to vector<16x320xf32>
      %156 = arith.select %154, %152, %155 : vector<16x320xi1>, vector<16x320xf32>
      %157 = arith.truncf %156 : vector<16x320xf32> to vector<16x320xbf16>
      %c0_140 = arith.constant 0 : index
      %c42_141 = arith.constant 42 : index
      %158 = vector.load %arg11[%c0_140, %c42_141] : memref<16x512xbf16, #tpu.memory_space<vmem>>, vector<16x320xbf16>
      tpu.vector_store %arg11[%c0_140, %c42_141], %157 {strides = array<i32>} : memref<16x512xbf16, #tpu.memory_space<vmem>>, vector<16x320xbf16>,
      %cst_142 = arith.constant 0.000000e+00 : f32
      %159 = vector.broadcast %cst_142 : f32 to vector<16x320xf32>
      %c0_143 = arith.constant 0 : index
      %c0_144 = arith.constant 0 : index
      %160 = vector.load %arg11[%c0_143, %c0_144] : memref<16x512xbf16, #tpu.memory_space<vmem>>, vector<16x320xbf16>
      %c0_145 = arith.constant 0 : index
      %c1_146 = arith.constant 1 : index
      %161 = vector.load %arg11[%c0_145, %c1_146] : memref<16x512xbf16, #tpu.memory_space<vmem>>, vector<16x320xbf16>
      %c0_147 = arith.constant 0 : index
      %c2_148 = arith.constant 2 : index
      %162 = vector.load %arg11[%c0_147, %c2_148] : memref<16x512xbf16, #tpu.memory_space<vmem>>, vector<16x320xbf16>
      %c0_149 = arith.constant 0 : index
      %c3_150 = arith.constant 3 : index
      %163 = vector.load %arg11[%c0_149, %c3_150] : memref<16x512xbf16, #tpu.memory_space<vmem>>, vector<16x320xbf16>
      %c0_151 = arith.constant 0 : index
      %c4_152 = arith.constant 4 : index
      %164 = vector.load %arg11[%c0_151, %c4_152] : memref<16x512xbf16, #tpu.memory_space<vmem>>, vector<16x320xbf16>
      %c0_153 = arith.constant 0 : index
      %c20_154 = arith.constant 20 : index
      %165 = vector.load %arg11[%c0_153, %c20_154] : memref<16x512xbf16, #tpu.memory_space<vmem>>, vector<16x320xbf16>
      %c0_155 = arith.constant 0 : index
      %c21_156 = arith.constant 21 : index
      %166 = vector.load %arg11[%c0_155, %c21_156] : memref<16x512xbf16, #tpu.memory_space<vmem>>, vector<16x320xbf16>
      %c0_157 = arith.constant 0 : index
      %c22_158 = arith.constant 22 : index
      %167 = vector.load %arg11[%c0_157, %c22_158] : memref<16x512xbf16, #tpu.memory_space<vmem>>, vector<16x320xbf16>
      %c0_159 = arith.constant 0 : index
      %c23_160 = arith.constant 23 : index
      %168 = vector.load %arg11[%c0_159, %c23_160] : memref<16x512xbf16, #tpu.memory_space<vmem>>, vector<16x320xbf16>
      %c0_161 = arith.constant 0 : index
      %c24_162 = arith.constant 24 : index
      %169 = vector.load %arg11[%c0_161, %c24_162] : memref<16x512xbf16, #tpu.memory_space<vmem>>, vector<16x320xbf16>
      %c0_163 = arith.constant 0 : index
      %c40_164 = arith.constant 40 : index
      %170 = vector.load %arg11[%c0_163, %c40_164] : memref<16x512xbf16, #tpu.memory_space<vmem>>, vector<16x320xbf16>
      %c0_165 = arith.constant 0 : index
      %c41_166 = arith.constant 41 : index
      %171 = vector.load %arg11[%c0_165, %c41_166] : memref<16x512xbf16, #tpu.memory_space<vmem>>, vector<16x320xbf16>
      %c0_167 = arith.constant 0 : index
      %c42_168 = arith.constant 42 : index
      %172 = vector.load %arg11[%c0_167, %c42_168] : memref<16x512xbf16, #tpu.memory_space<vmem>>, vector<16x320xbf16>
      %c0_169 = arith.constant 0 : index
      %c43_170 = arith.constant 43 : index
      %173 = vector.load %arg11[%c0_169, %c43_170] : memref<16x512xbf16, #tpu.memory_space<vmem>>, vector<16x320xbf16>
      %c0_171 = arith.constant 0 : index
      %c44_172 = arith.constant 44 : index
      %174 = vector.load %arg11[%c0_171, %c44_172] : memref<16x512xbf16, #tpu.memory_space<vmem>>, vector<16x320xbf16>
      %c0_173 = arith.constant 0 : index
      %c60_174 = arith.constant 60 : index
      %175 = vector.load %arg11[%c0_173, %c60_174] : memref<16x512xbf16, #tpu.memory_space<vmem>>, vector<16x320xbf16>
      %176 = tpu.concatenate %160, %161, %162, %163, %164, %165, %166, %167, %168, %169, %170, %171, %172, %173, %174, %175 in 0 : vector<16x320xbf16>, vector<16x320xbf16>, vector<16x320xbf16>, vector<16x320xbf16>, vector<16x320xbf16>, vector<16x320xbf16>, vector<16x320xbf16>, vector<16x320xbf16>, vector<16x320xbf16>, vector<16x320xbf16>, vector<16x320xbf16>, vector<16x320xbf16>, vector<16x320xbf16>, vector<16x320xbf16>, vector<16x320xbf16>, vector<16x320xbf16> -> vector<256x320xbf16>
      %177 = vector.extract_strided_slice %147 {offsets = [0, 0], sizes = [16, 256], strides = [1, 1]} : vector<16x400xbf16> to vector<16x256xbf16>
      %cst_175 = arith.constant dense<0.000000e+00> : vector<16x320xf32>
      %178 = tpu.matmul %177, %176, %cst_175 {dimension_numbers = #tpu.dot_dimension_numbers<[1], [0], [0], [1], [0, 0, 1, 1], [], []>} : vector<16x256xbf16>, vector<256x320xbf16>, vector<16x320xf32> -> vector<16x320xf32>
      %179 = arith.addf %159, %178 : vector<16x320xf32>
      %c0_176 = arith.constant 0 : index
      %c61_177 = arith.constant 61 : index
      %180 = vector.load %arg11[%c0_176, %c61_177] : memref<16x512xbf16, #tpu.memory_space<vmem>>, vector<16x320xbf16>
      %c0_178 = arith.constant 0 : index
      %c62_179 = arith.constant 62 : index
      %181 = vector.load %arg11[%c0_178, %c62_179] : memref<16x512xbf16, #tpu.memory_space<vmem>>, vector<16x320xbf16>
      %c0_180 = arith.constant 0 : index
      %c63_181 = arith.constant 63 : index
      %182 = vector.load %arg11[%c0_180, %c63_181] : memref<16x512xbf16, #tpu.memory_space<vmem>>, vector<16x320xbf16>
      %c0_182 = arith.constant 0 : index
      %c64_183 = arith.constant 64 : index
      %183 = vector.load %arg11[%c0_182, %c64_183] : memref<16x512xbf16, #tpu.memory_space<vmem>>, vector<16x320xbf16>
      %c0_184 = arith.constant 0 : index
      %c80_185 = arith.constant 80 : index
      %184 = vector.load %arg11[%c0_184, %c80_185] : memref<16x512xbf16, #tpu.memory_space<vmem>>, vector<16x320xbf16>
      %c0_186 = arith.constant 0 : index
      %c81_187 = arith.constant 81 : index
      %185 = vector.load %arg11[%c0_186, %c81_187] : memref<16x512xbf16, #tpu.memory_space<vmem>>, vector<16x320xbf16>
      %c0_188 = arith.constant 0 : index
      %c82_189 = arith.constant 82 : index
      %186 = vector.load %arg11[%c0_188, %c82_189] : memref<16x512xbf16, #tpu.memory_space<vmem>>, vector<16x320xbf16>
      %c0_190 = arith.constant 0 : index
      %c83_191 = arith.constant 83 : index
      %187 = vector.load %arg11[%c0_190, %c83_191] : memref<16x512xbf16, #tpu.memory_space<vmem>>, vector<16x320xbf16>
      %c0_192 = arith.constant 0 : index
      %c84_193 = arith.constant 84 : index
      %188 = vector.load %arg11[%c0_192, %c84_193] : memref<16x512xbf16, #tpu.memory_space<vmem>>, vector<16x320xbf16>
      %189 = tpu.concatenate %180, %181, %182, %183, %184, %185, %186, %187, %188 in 0 : vector<16x320xbf16>, vector<16x320xbf16>, vector<16x320xbf16>, vector<16x320xbf16>, vector<16x320xbf16>, vector<16x320xbf16>, vector<16x320xbf16>, vector<16x320xbf16>, vector<16x320xbf16> -> vector<144x320xbf16>
      %190 = vector.extract_strided_slice %147 {offsets = [0, 256], sizes = [16, 144], strides = [1, 1]} : vector<16x400xbf16> to vector<16x144xbf16>
      %cst_194 = arith.constant dense<0.000000e+00> : vector<16x320xf32>
      %191 = tpu.matmul %190, %189, %cst_194 {dimension_numbers = #tpu.dot_dimension_numbers<[1], [0], [0], [1], [0, 0, 1, 1], [], []>} : vector<16x144xbf16>, vector<144x320xbf16>, vector<16x320xf32> -> vector<16x320xf32>
      %192 = arith.addf %179, %191 : vector<16x320xf32>
      %193 = vector.broadcast %150 : vector<16x1xf32> to vector<16x320xf32>
      %194 = arith.addf %192, %193 : vector<16x320xf32>
      %195 = arith.addf %arg13, %194 : vector<16x320xf32>
      scf.yield %195 : vector<16x320xf32>
    }
    %c2_i32_64 = arith.constant 2 : i32
    %c0_65 = arith.constant 0 : index
    %c0_66 = arith.constant 0 : index
    %86 = vector.load %arg8[%c0_65, %c0_66] : memref<24x16xbf16, #tpu.memory_space<vmem>>, vector<24x16xbf16>
    %87 = arith.truncf %85 : vector<16x320xf32> to vector<16x320xbf16>
    %cst_67 = arith.constant dense<0.000000e+00> : vector<24x320xf32>
    %88 = tpu.matmul %86, %87, %cst_67 {dimension_numbers = #tpu.dot_dimension_numbers<[1], [0], [0], [1], [0, 0, 1, 1], [], []>} : vector<24x16xbf16>, vector<16x320xbf16>, vector<24x320xf32> -> vector<24x320xf32>
    %c0_68 = arith.constant 0 : index
    %c0_69 = arith.constant 0 : index
    %89 = vector.load %arg9[%c0_68, %c0_69] : memref<24x1xf32, #tpu.memory_space<vmem>>, vector<24x1xf32>
    %90 = vector.broadcast %89 : vector<24x1xf32> to vector<24x320xf32>
    %91 = arith.addf %88, %90 : vector<24x320xf32>
    %c0_70 = arith.constant 0 : index
    %c0_71 = arith.constant 0 : index
    %c0_72 = arith.constant 0 : index
    %92 = vector.load %arg10[%c0_70, %c0_71, %c0_72] : memref<1x24x320xf32, #tpu.memory_space<vmem>>, vector<1x24x320xf32>
    %93 = vector.shape_cast %92 : vector<1x24x320xf32> to vector<24x320xf32>
    %94 = vector.shape_cast %91 : vector<24x320xf32> to vector<1x24x320xf32>
    tpu.vector_store %arg10[%c0_70, %c0_71, %c0_72], %94 {strides = array<i32>} : memref<1x24x320xf32, #tpu.memory_space<vmem>>, vector<1x24x320xf32>,
    return
  }
  func.func @transform_0(%arg0: i32) -> (i32, i32, i32) {
    %c0_i32 = arith.constant 0 : i32
    %c0_i32_0 = arith.constant 0 : i32
    %c0_i32_1 = arith.constant 0 : i32
    return %arg0, %c0_i32, %c0_i32_0 : i32, i32, i32
  }
  func.func @transform_1(%arg0: i32) -> (i32, i32) {
    %c0_i32 = arith.constant 0 : i32
    %c0_i32_0 = arith.constant 0 : i32
    %c0_i32_1 = arith.constant 0 : i32
    return %c0_i32, %c0_i32_0 : i32, i32
  }
  func.func @transform_2(%arg0: i32) -> (i32, i32) {
    %c0_i32 = arith.constant 0 : i32
    %c0_i32_0 = arith.constant 0 : i32
    %c0_i32_1 = arith.constant 0 : i32
    return %c0_i32, %c0_i32_0 : i32, i32
  }
  func.func @transform_3(%arg0: i32) -> (i32, i32, i32) {
    %c0_i32 = arith.constant 0 : i32
    %c0_i32_0 = arith.constant 0 : i32
    %c0_i32_1 = arith.constant 0 : i32
    %c0_i32_2 = arith.constant 0 : i32
    return %c0_i32, %c0_i32_0, %c0_i32_1 : i32, i32, i32
  }
  func.func @transform_4(%arg0: i32) -> (i32, i32, i32) {
    %c0_i32 = arith.constant 0 : i32
    %c0_i32_0 = arith.constant 0 : i32
    %c0_i32_1 = arith.constant 0 : i32
    %c0_i32_2 = arith.constant 0 : i32
    return %c0_i32, %c0_i32_0, %c0_i32_1 : i32, i32, i32
  }
  func.func @transform_5(%arg0: i32) -> (i32, i32, i32) {
    %c0_i32 = arith.constant 0 : i32
    %c0_i32_0 = arith.constant 0 : i32
    %c0_i32_1 = arith.constant 0 : i32
    %c0_i32_2 = arith.constant 0 : i32
    return %c0_i32, %c0_i32_0, %c0_i32_1 : i32, i32, i32
  }
  func.func @transform_6(%arg0: i32) -> (i32, i32, i32) {
    %c0_i32 = arith.constant 0 : i32
    %c0_i32_0 = arith.constant 0 : i32
    %c0_i32_1 = arith.constant 0 : i32
    %c0_i32_2 = arith.constant 0 : i32
    return %c0_i32, %c0_i32_0, %c0_i32_1 : i32, i32, i32
  }
  func.func @transform_7(%arg0: i32) -> (i32, i32) {
    %c0_i32 = arith.constant 0 : i32
    %c0_i32_0 = arith.constant 0 : i32
    %c0_i32_1 = arith.constant 0 : i32
    return %c0_i32, %c0_i32_0 : i32, i32
  }
  func.func @transform_8(%arg0: i32) -> (i32, i32) {
    %c0_i32 = arith.constant 0 : i32
    %c0_i32_0 = arith.constant 0 : i32
    %c0_i32_1 = arith.constant 0 : i32
    return %c0_i32, %c0_i32_0 : i32, i32
  }
  func.func @transform_9(%arg0: i32) -> (i32, i32, i32) {
    %c0_i32 = arith.constant 0 : i32
    %c0_i32_0 = arith.constant 0 : i32
    %c0_i32_1 = arith.constant 0 : i32
    return %arg0, %c0_i32, %c0_i32_0 : i32, i32, i32
  }
}

</mosaic_0001>

<llo_original>
// kernel: resnet_con_forward.1
$region0: #{resnet_con_forward.1}
  #allocation0 [shape = 'u32[]', space=smem, size = 0x4, offset = 0x4, fixed_abs, tag = 'smem constant byte address 0x4 - core index']
  #allocation1 [shape = 'u32[144,128]{1,0:T(1,128)}', space=vmem, size = 0x12000, scoped, tag = 'internal scratch']
  #allocation2 [shape = 'bf16[16,512]{1,0:T(16,128)(2,1)}', space=vmem, size = 0x4000, scoped, tag = 'scratch operand']
  %s0 = inlined_call_operand.vmem [shape: bf16[2,16,512], index: 0, kind: input, shape index: {}]
  %s1 = inlined_call_operand.vmem [shape: bf16[16,400], index: 1, kind: input, shape index: {}]
  %s2 = inlined_call_operand.vmem [shape: f32[16,1], index: 2, kind: input, shape index: {}]
  %s3 = inlined_call_operand.vmem [shape: bf16[2,16,400], index: 3, kind: input, shape index: {}]
  %s4 = inlined_call_operand.vmem [shape: f32[2,16,1], index: 4, kind: input, shape index: {}]
  %s5 = inlined_call_operand.vmem [shape: bf16[2,16,400], index: 5, kind: input, shape index: {}]
  %s6 = inlined_call_operand.vmem [shape: f32[2,16,1], index: 6, kind: input, shape index: {}]
  %s7 = inlined_call_operand.vmem [shape: bf16[24,16], index: 7, kind: input, shape index: {}]
  %s8 = inlined_call_operand.vmem [shape: f32[24,1], index: 8, kind: input, shape index: {}]
  %s9 = inlined_call_operand.vmem [shape: f32[2,24,320], index: 9, kind: output, shape index: {}]
  %s10 = sld [smem:[#allocation0]]
  $region76: #{resnet_con_forward.1} parent=0
    _
  %s12 = ssub.s32 1, %s10
  %s13 = scalar_select 0, %s12, %s10
  loop: start=0, step=1, limit=4
  $region2: #{resnet_con_forward.1} parent=0 // loop_pre_header
    _
  $region3: #{resnet_con_forward.1} parent=0 // loop_header
    %s15 = sphi 0, %s19
    %p16 = scmp.ge.s32.totalorder %s15, 4
    %s25 = sphi 0, %s27
    %s28 = sphi 0, %s25
    %s29 = sphi 0, %s28
    %s45 = sphi 0, %s29
    %s49 = sphi 0, %s49
    %s51 = sphi 0, %s49
    %s52 = sphi 0, %s51
    %s66 = sphi 0, %s52
    %s70 = sphi 0, %s70
    %s72 = sphi 0, %s70
    %s73 = sphi 0, %s72
    %s87 = sphi 0, %s73
    %s91 = sphi 0, %s91
    %s93 = sphi 0, %s91
    %s94 = sphi 0, %s93
    %s108 = sphi 0, %s94
    %s112 = sphi 0, %s112
    %s114 = sphi 0, %s112
    %s115 = sphi 0, %s114
    %s129 = sphi 0, %s115
    %s133 = sphi 0, %s133
    %s135 = sphi 0, %s133
    %s136 = sphi 0, %s135
    %s150 = sphi 0, %s136
    %s154 = sphi 0, %s154
    %s156 = sphi 0, %s154
    %s157 = sphi 0, %s156
    %s171 = sphi 0, %s157
    %s175 = sphi 0, %s175
    %s177 = sphi 0, %s175
    %s178 = sphi 0, %s177
    %s192 = sphi 0, %s178
    %s196 = sphi 0, %s196
    %s198 = sphi 0, %s196
    %s199 = sphi 0, %s198
    %s213 = sphi 0, %s199
    %s219 = sphi 0, %s221
    %s222 = sphi 0, %s219
    %s223 = sphi 0, %s222
    %s239 = sphi 0, %s223
  $region4: #{resnet_con_forward.1} parent=0 // loop_header_branch
    %18 = sbr.rel (%p16) target = $region8
  $region5: #{resnet_con_forward.1} parent=0 // loop_body
    %s20 = ssub.s32 %s15, 1
    %s21 = ssub.s32 %s15, 2
    %s22 = sadd.s32 %s15, 1
    %s23 = ssub.s32 %s15, %s22
    %p24 = scmp.eq.s32.totalorder %s23, 0
    %s26 = sadd.s32 %s25, 1
    %s27 = scalar_select %p24, %s25, %s26
    %p30 = pneg %p24
    %p31 = scmp.eq.s32.totalorder %s15, 1
    %p32 = por %p30, %p31
    %p33 = scmp.ne.s32.totalorder %s25, %s28
    %p34 = scmp.eq.s32.totalorder %s15, 0
    %p35 = por %p33, %p34
    %p36 = scmp.ne.s32.totalorder %s25, %s28
    %p37 = scmp.eq.s32.totalorder %s20, 1
    %p38 = por %p36, %p37
    %p39 = scmp.ne.s32.totalorder %s28, %s29
    %p40 = scmp.eq.s32.totalorder %s20, 0
    %p41 = por %p39, %p40
    %p42 = scmp.ne.s32.totalorder %s28, %s29
    %p43 = scmp.eq.s32.totalorder %s21, 1
    %p44 = por %p42, %p43
    %p46 = scmp.ne.s32.totalorder %s29, %s45
    %p47 = scmp.eq.s32.totalorder %s21, 0
    %p48 = por %p46, %p47
    %s50 = sadd.s32 %s49, 1
    %p53 = scmp.eq.s32.totalorder %s15, 1
    %p54 = scmp.ne.s32.totalorder %s49, %s51
    %p55 = scmp.eq.s32.totalorder %s15, 0
    %p56 = por %p54, %p55
    %p57 = scmp.ne.s32.totalorder %s49, %s51
    %p58 = scmp.eq.s32.totalorder %s20, 1
    %p59 = por %p57, %p58
    %p60 = scmp.ne.s32.totalorder %s51, %s52
    %p61 = scmp.eq.s32.totalorder %s20, 0
    %p62 = por %p60, %p61
    %p63 = scmp.ne.s32.totalorder %s51, %s52
    %p64 = scmp.eq.s32.totalorder %s21, 1
    %p65 = por %p63, %p64
    %p67 = scmp.ne.s32.totalorder %s52, %s66
    %p68 = scmp.eq.s32.totalorder %s21, 0
    %p69 = por %p67, %p68
    %s71 = sadd.s32 %s70, 1
    %p74 = scmp.eq.s32.totalorder %s15, 1
    %p75 = scmp.ne.s32.totalorder %s70, %s72
    %p76 = scmp.eq.s32.totalorder %s15, 0
    %p77 = por %p75, %p76
    %p78 = scmp.ne.s32.totalorder %s70, %s72
    %p79 = scmp.eq.s32.totalorder %s20, 1
    %p80 = por %p78, %p79
    %p81 = scmp.ne.s32.totalorder %s72, %s73
    %p82 = scmp.eq.s32.totalorder %s20, 0
    %p83 = por %p81, %p82
    %p84 = scmp.ne.s32.totalorder %s72, %s73
    %p85 = scmp.eq.s32.totalorder %s21, 1
    %p86 = por %p84, %p85
    %p88 = scmp.ne.s32.totalorder %s73, %s87
    %p89 = scmp.eq.s32.totalorder %s21, 0
    %p90 = por %p88, %p89
    %s92 = sadd.s32 %s91, 1
    %p95 = scmp.eq.s32.totalorder %s15, 1
    %p96 = scmp.ne.s32.totalorder %s91, %s93
    %p97 = scmp.eq.s32.totalorder %s15, 0
    %p98 = por %p96, %p97
    %p99 = scmp.ne.s32.totalorder %s91, %s93
    %p100 = scmp.eq.s32.totalorder %s20, 1
    %p101 = por %p99, %p100
    %p102 = scmp.ne.s32.totalorder %s93, %s94
    %p103 = scmp.eq.s32.totalorder %s20, 0
    %p104 = por %p102, %p103
    %p105 = scmp.ne.s32.totalorder %s93, %s94
    %p106 = scmp.eq.s32.totalorder %s21, 1
    %p107 = por %p105, %p106
    %p109 = scmp.ne.s32.totalorder %s94, %s108
    %p110 = scmp.eq.s32.totalorder %s21, 0
    %p111 = por %p109, %p110
    %s113 = sadd.s32 %s112, 1
    %p116 = scmp.eq.s32.totalorder %s15, 1
    %p117 = scmp.ne.s32.totalorder %s112, %s114
    %p118 = scmp.eq.s32.totalorder %s15, 0
    %p119 = por %p117, %p118
    %p120 = scmp.ne.s32.totalorder %s112, %s114
    %p121 = scmp.eq.s32.totalorder %s20, 1
    %p122 = por %p120, %p121
    %p123 = scmp.ne.s32.totalorder %s114, %s115
    %p124 = scmp.eq.s32.totalorder %s20, 0
    %p125 = por %p123, %p124
    %p126 = scmp.ne.s32.totalorder %s114, %s115
    %p127 = scmp.eq.s32.totalorder %s21, 1
    %p128 = por %p126, %p127
    %p130 = scmp.ne.s32.totalorder %s115, %s129
    %p131 = scmp.eq.s32.totalorder %s21, 0
    %p132 = por %p130, %p131
    %s134 = sadd.s32 %s133, 1
    %p137 = scmp.eq.s32.totalorder %s15, 1
    %p138 = scmp.ne.s32.totalorder %s133, %s135
    %p139 = scmp.eq.s32.totalorder %s15, 0
    %p140 = por %p138, %p139
    %p141 = scmp.ne.s32.totalorder %s133, %s135
    %p142 = scmp.eq.s32.totalorder %s20, 1
    %p143 = por %p141, %p142
    %p144 = scmp.ne.s32.totalorder %s135, %s136
    %p145 = scmp.eq.s32.totalorder %s20, 0
    %p146 = por %p144, %p145
    %p147 = scmp.ne.s32.totalorder %s135, %s136
    %p148 = scmp.eq.s32.totalorder %s21, 1
    %p149 = por %p147, %p148
    %p151 = scmp.ne.s32.totalorder %s136, %s150
    %p152 = scmp.eq.s32.totalorder %s21, 0
    %p153 = por %p151, %p152
    %s155 = sadd.s32 %s154, 1
    %p158 = scmp.eq.s32.totalorder %s15, 1
    %p159 = scmp.ne.s32.totalorder %s154, %s156
    %p160 = scmp.eq.s32.totalorder %s15, 0
    %p161 = por %p159, %p160
    %p162 = scmp.ne.s32.totalorder %s154, %s156
    %p163 = scmp.eq.s32.totalorder %s20, 1
    %p164 = por %p162, %p163
    %p165 = scmp.ne.s32.totalorder %s156, %s157
    %p166 = scmp.eq.s32.totalorder %s20, 0
    %p167 = por %p165, %p166
    %p168 = scmp.ne.s32.totalorder %s156, %s157
    %p169 = scmp.eq.s32.totalorder %s21, 1
    %p170 = por %p168, %p169
    %p172 = scmp.ne.s32.totalorder %s157, %s171
    %p173 = scmp.eq.s32.totalorder %s21, 0
    %p174 = por %p172, %p173
    %s176 = sadd.s32 %s175, 1
    %p179 = scmp.eq.s32.totalorder %s15, 1
    %p180 = scmp.ne.s32.totalorder %s175, %s177
    %p181 = scmp.eq.s32.totalorder %s15, 0
    %p182 = por %p180, %p181
    %p183 = scmp.ne.s32.totalorder %s175, %s177
    %p184 = scmp.eq.s32.totalorder %s20, 1
    %p185 = por %p183, %p184
    %p186 = scmp.ne.s32.totalorder %s177, %s178
    %p187 = scmp.eq.s32.totalorder %s20, 0
    %p188 = por %p186, %p187
    %p189 = scmp.ne.s32.totalorder %s177, %s178
    %p190 = scmp.eq.s32.totalorder %s21, 1
    %p191 = por %p189, %p190
    %p193 = scmp.ne.s32.totalorder %s178, %s192
    %p194 = scmp.eq.s32.totalorder %s21, 0
    %p195 = por %p193, %p194
    %s197 = sadd.s32 %s196, 1
    %p200 = scmp.eq.s32.totalorder %s15, 1
    %p201 = scmp.ne.s32.totalorder %s196, %s198
    %p202 = scmp.eq.s32.totalorder %s15, 0
    %p203 = por %p201, %p202
    %p204 = scmp.ne.s32.totalorder %s196, %s198
    %p205 = scmp.eq.s32.totalorder %s20, 1
    %p206 = por %p204, %p205
    %p207 = scmp.ne.s32.totalorder %s198, %s199
    %p208 = scmp.eq.s32.totalorder %s20, 0
    %p209 = por %p207, %p208
    %p210 = scmp.ne.s32.totalorder %s198, %s199
    %p211 = scmp.eq.s32.totalorder %s21, 1
    %p212 = por %p210, %p211
    %p214 = scmp.ne.s32.totalorder %s199, %s213
    %p215 = scmp.eq.s32.totalorder %s21, 0
    %p216 = por %p214, %p215
    %s217 = ssub.s32 %s15, %s22
    %p218 = scmp.eq.s32.totalorder %s217, 0
    %s220 = sadd.s32 %s219, 1
    %s221 = scalar_select %p218, %s219, %s220
    %p224 = pneg %p218
    %p225 = scmp.eq.s32.totalorder %s15, 1
    %p226 = por %p224, %p225
    %p227 = scmp.ne.s32.totalorder %s219, %s222
    %p228 = scmp.eq.s32.totalorder %s15, 0
    %p229 = por %p227, %p228
    %p230 = scmp.ne.s32.totalorder %s219, %s222
    %p231 = scmp.eq.s32.totalorder %s20, 1
    %p232 = por %p230, %p231
    %p233 = scmp.ne.s32.totalorder %s222, %s223
    %p234 = scmp.eq.s32.totalorder %s20, 0
    %p235 = por %p233, %p234
    %p236 = scmp.ne.s32.totalorder %s222, %s223
    %p237 = scmp.eq.s32.totalorder %s21, 1
    %p238 = por %p236, %p237
    %p240 = scmp.ne.s32.totalorder %s223, %s239
    %p241 = scmp.eq.s32.totalorder %s21, 0
    %p242 = por %p240, %p241
    %p243 = scmp.le.s32.totalorder 1, %s15
    %p244 = scmp.lt.s32.totalorder %s15, 3
    %p245 = pnand %p243, %p244
    %p246 = pneg %p245
    // Predicated region
    $region9: #{resnet_con_forward.1} parent=5 // pred_check
      _
    $region10: #{resnet_con_forward.1} parent=5 // pred_check_branch
      %248 = sbr.rel (%p245) target = $region12
    $region11: #{resnet_con_forward.1} parent=5 // pred_region
      %s249 = ssub.s32 %s15, 1
      // Predicated region
      $region13: #{resnet_con_forward.1} parent=11 // pred_check
        %p250 = pneg %p62
      $region14: #{resnet_con_forward.1} parent=11 // pred_check_branch
        %252 = sbr.rel (%p250) target = $region16
      $region15: #{resnet_con_forward.1} parent=11 // pred_region
        _
      $region16: #{resnet_con_forward.1} parent=11 // pred_fallthru
        _
      // Predicated region
      $region17: #{resnet_con_forward.1} parent=11 // pred_check
        %p253 = pneg %p83
      $region18: #{resnet_con_forward.1} parent=11 // pred_check_branch
        %255 = sbr.rel (%p253) target = $region20
      $region19: #{resnet_con_forward.1} parent=11 // pred_region
        _
      $region20: #{resnet_con_forward.1} parent=11 // pred_fallthru
        _
      // Predicated region
      $region21: #{resnet_con_forward.1} parent=11 // pred_check
        %p256 = pneg %p104
      $region22: #{resnet_con_forward.1} parent=11 // pred_check_branch
        %258 = sbr.rel (%p256) target = $region24
      $region23: #{resnet_con_forward.1} parent=11 // pred_region
        _
      $region24: #{resnet_con_forward.1} parent=11 // pred_fallthru
        _
      // Predicated region
      $region25: #{resnet_con_forward.1} parent=11 // pred_check
        %p259 = pneg %p125
      $region26: #{resnet_con_forward.1} parent=11 // pred_check_branch
        %261 = sbr.rel (%p259) target = $region28
      $region27: #{resnet_con_forward.1} parent=11 // pred_region
        _
      $region28: #{resnet_con_forward.1} parent=11 // pred_fallthru
        _
      // Predicated region
      $region29: #{resnet_con_forward.1} parent=11 // pred_check
        %p262 = pneg %p146
      $region30: #{resnet_con_forward.1} parent=11 // pred_check_branch
        %264 = sbr.rel (%p262) target = $region32
      $region31: #{resnet_con_forward.1} parent=11 // pred_region
        _
      $region32: #{resnet_con_forward.1} parent=11 // pred_fallthru
        _
      // Predicated region
      $region33: #{resnet_con_forward.1} parent=11 // pred_check
        %p265 = pneg %p167
      $region34: #{resnet_con_forward.1} parent=11 // pred_check_branch
        %267 = sbr.rel (%p265) target = $region36
      $region35: #{resnet_con_forward.1} parent=11 // pred_region
        _
      $region36: #{resnet_con_forward.1} parent=11 // pred_fallthru
        _
      // Predicated region
      $region37: #{resnet_con_forward.1} parent=11 // pred_check
        %p268 = pneg %p188
      $region38: #{resnet_con_forward.1} parent=11 // pred_check_branch
        %270 = sbr.rel (%p268) target = $region40
      $region39: #{resnet_con_forward.1} parent=11 // pred_region
        _
      $region40: #{resnet_con_forward.1} parent=11 // pred_fallthru
        _
      // Predicated region
      $region41: #{resnet_con_forward.1} parent=11 // pred_check
        %p271 = pneg %p209
      $region42: #{resnet_con_forward.1} parent=11 // pred_check_branch
        %273 = sbr.rel (%p271) target = $region44
      $region43: #{resnet_con_forward.1} parent=11 // pred_region
        _
      $region44: #{resnet_con_forward.1} parent=11 // pred_fallthru
        _
    $region12: #{resnet_con_forward.1} parent=5 // pred_fallthru
      _
    %p274 = scmp.lt.s32.totalorder %s15, 2
    // Predicated region
    $region45: #{resnet_con_forward.1} parent=5 // pred_check
      %p275 = pneg %p274
    $region46: #{resnet_con_forward.1} parent=5 // pred_check_branch
      %277 = sbr.rel (%p275) target = $region48
    $region47: #{resnet_con_forward.1} parent=5 // pred_region
      // Predicated region
      $region49: #{resnet_con_forward.1} parent=47 // pred_check
        %p278 = pneg %p35
      $region50: #{resnet_con_forward.1} parent=47 // pred_check_branch
        %280 = sbr.rel (%p278) target = $region52
      $region51: #{resnet_con_forward.1} parent=47 // pred_region
        %p281 = scmp.lt.s32.totalorder %s15, 1
        %s282 = scalar_select %p281, %s15, 1
        %s283 = smul.addr %s282, 8
        %s284 = smul.addr %s283, 4
        %s285 = scalar_lea.vmem %s0, %s284
      $region52: #{resnet_con_forward.1} parent=47 // pred_fallthru
        _
    $region48: #{resnet_con_forward.1} parent=5 // pred_fallthru
      _
    %p286 = scmp.le.s32.totalorder 1, %s15
    %p287 = scmp.lt.s32.totalorder %s15, 3
    %p288 = pnand %p286, %p287
    %p289 = pneg %p288
    // Predicated region
    $region53: #{resnet_con_forward.1} parent=5 // pred_check
      _
    $region54: #{resnet_con_forward.1} parent=5 // pred_check_branch
      %291 = sbr.rel (%p288) target = $region56
    $region55: #{resnet_con_forward.1} parent=5 // pred_region
      %s292 = ssub.s32 %s15, 1
      %p293 = scmp.lt.s32.totalorder %s20, 1
      %s294 = scalar_select %p293, %s20, 1
      %s295 = smul.addr %s294, 8
      %s296 = smul.addr %s295, 4
      %s297 = scalar_lea.vmem %s0, %s296
      %p298 = pneg %p41
      %p299 = pneg %p38
      %p300 = pneg %p62
      %p301 = pneg %p59
      %p302 = pneg %p83
      %p303 = pneg %p80
      %p304 = pneg %p104
      %p305 = pneg %p101
      %p306 = pneg %p125
      %p307 = pneg %p122
      %p308 = pneg %p146
      %p309 = pneg %p143
      %p310 = pneg %p167
      %p311 = pneg %p164
      %p312 = pneg %p188
      %p313 = pneg %p185
      %p314 = pneg %p209
      %p315 = pneg %p206
      %p316 = pneg %p235
      %p317 = pneg %p232
      %p318 = scmp.lt.s32.totalorder %s20, 1
      %s319 = scalar_select %p318, %s20, 1
      %s320 = smul.addr %s319, 9
      %s321 = smul.addr %s320, 8
      %s322 = scalar_lea.vmem %s9, %s321
      %p323 = scmp.lt.s32.totalorder %s20, 1
      %s324 = scalar_select %p323, %s20, 1
      %s325 = smul.addr %s324, 8
      %s326 = smul.addr %s325, 4
      %s327 = scalar_lea.vmem %s0, %s326
      %p328 = scmp.lt.s32.totalorder %s20, 1
      %s329 = scalar_select %p328, %s20, 1
      %s330 = smul.addr %s329, 9
      %s331 = smul.addr %s330, 8
      %s332 = scalar_lea.vmem %s9, %s331
      %v334 = vlaneseq
      %v335 = vand.u32 %v334, 127
      %v336 = vadd.s32 %v335, 128
      %v337 = vadd.s32 %v335, 256
      %vm338 = vcmp.lt.s32.totalorder %v335, 0
      %v339 = vsub.s32 0, %v335
      %v340 = vsel %vm338, %v339, %v335
      %v341 = vmul.u32.u64.compose %v340, 3435973837
      %v342 = vextract.low.u32 %v341
      %v343 = vextract.high.u32 %v341
      %v344 = vshrl.u32 %v343, 4
      %v345 = vmul.u32 %v344, 20
      %v346 = vsub.s32 %v340, %v345
      %v347 = vsub.s32 0, %v346
      %v348 = vsel %vm338, %v347, %v346
      %vm349 = vcmp.lt.s32.totalorder %v336, 0
      %v350 = vsub.s32 0, %v336
      %v351 = vsel %vm349, %v350, %v336
      %v352 = vmul.u32.u64.compose %v351, 3435973837
      %v353 = vextract.low.u32 %v352
      %v354 = vextract.high.u32 %v352
      %v355 = vshrl.u32 %v354, 4
      %v356 = vmul.u32 %v355, 20
      %v357 = vsub.s32 %v351, %v356
      %v358 = vsub.s32 0, %v357
      %v359 = vsel %vm349, %v358, %v357
      %vm360 = vcmp.lt.s32.totalorder %v337, 0
      %v361 = vsub.s32 0, %v337
      %v362 = vsel %vm360, %v361, %v337
      %v363 = vmul.u32.u64.compose %v362, 3435973837
      %v364 = vextract.low.u32 %v363
      %v365 = vextract.high.u32 %v363
      %v366 = vshrl.u32 %v365, 4
      %v367 = vmul.u32 %v366, 20
      %v368 = vsub.s32 %v362, %v367
      %v369 = vsub.s32 0, %v368
      %v370 = vsel %vm360, %v369, %v368
      %vm371 = vcmp.ne.s32.totalorder %v348, 0
      %vm372 = vcmp.ne.s32.totalorder %v359, 0
      %vm373 = vcmp.ne.s32.totalorder %v370, 0
      %vm374 = vcmp.lt.s32.totalorder %v348, 0
      %vm375 = vcmp.lt.s32.totalorder %v359, 0
      %vm376 = vcmp.lt.s32.totalorder %v370, 0
      %vm377 = vmand %vm374, %vm371
      %vm378 = vmand %vm375, %vm372
      %vm379 = vmand %vm376, %vm373
      %v380 = vadd.s32 %v348, 20
      %v381 = vadd.s32 %v359, 20
      %v382 = vadd.s32 %v370, 20
      %v383 = vsel %vm377, %v380, %v348
      %v384 = vsel %vm378, %v381, %v359
      %v385 = vsel %vm379, %v382, %v370
      %vm386 = vcmp.lt.s32.totalorder %v383, 16
      %vm387 = vcmp.lt.s32.totalorder %v384, 16
      %vm388 = vcmp.lt.s32.totalorder %v385, 16
      %389 = vst [vmem:[#allocation2] sm:$0xff] 0
      %390 = vst [vmem:[#allocation2 + $0x8] sm:$0xff] 0
      %391 = vst [vmem:[#allocation2 + $0x10] sm:$0xff] 0
      %392 = vst [vmem:[#allocation2 + $0x18] sm:$0xff] 0
      %v393 = vld [vmem:[%s1] sm:$0xff]
      %v394 = vld [vmem:[%s1 + $0x8] sm:$0xff]
      %v395 = vld [vmem:[%s1 + $0x10] sm:$0xff]
      %v396 = vld [vmem:[%s1 + $0x18] sm:$0xff]
      %v397 = vld [vmem:[%s2] sm:$0xff]
      %v398 = vld [vmem:[%s2 + $0x8] sm:$0xff]
      %v399 = vld [vmem:[%s327] sm:$0xff]
      %v400 = vld [vmem:[%s327 + $0x8] sm:$0xf]
      %v401 = vld [vmem:[%s327 + $0x10] sm:$0xff]
      %v402 = vld [vmem:[%s327 + $0x18] sm:$0xf]
      %v407 = vunpack.c.l.b16 %v399
      %v408 = vunpack.c.h.b16 %v399
      %v409 = vunpack.c.l.b16 %v400
      %v410 = vunpack.c.l.b16 %v401
      %v411 = vunpack.c.h.b16 %v401
      %v412 = vunpack.c.l.b16 %v402
      %v413 = vpack.c.b16 %v410, %v407
      %v414 = vpack.c.b16 %v411, %v408
      %v415 = vpack.c.b16 %v412, %v409
      %419 = vrot.lane.b32.xlu0 %v413, 127
      %v420 = vpop.permute.xlu0 %419
      %421 = vrot.lane.b32.xlu0 %v414, 127
      %v422 = vpop.permute.xlu0 %421
      %423 = vrot.lane.b32.xlu0 %v415, 127
      %v424 = vpop.permute.xlu0 %423
      %vm425 = vcmask 1039360
      %v426 = vsel %vm425, %v420, %v422
      %v427 = vsel %vm425, %v422, %v424
      %431 = vrot.lane.b32.xlu0 %v413, 126
      %v432 = vpop.permute.xlu0 %431
      %433 = vrot.lane.b32.xlu0 %v414, 126
      %v434 = vpop.permute.xlu0 %433
      %435 = vrot.lane.b32.xlu0 %v415, 126
      %v436 = vpop.permute.xlu0 %435
      %vm437 = vcmask 1031168
      %v438 = vsel %vm437, %v432, %v434
      %v439 = vsel %vm437, %v434, %v436
      %443 = vrot.lane.b32.xlu0 %v413, 125
      %v444 = vpop.permute.xlu0 %443
      %445 = vrot.lane.b32.xlu0 %v414, 125
      %v446 = vpop.permute.xlu0 %445
      %447 = vrot.lane.b32.xlu0 %v415, 125
      %v448 = vpop.permute.xlu0 %447
      %vm449 = vcmask 1022976
      %v450 = vsel %vm449, %v444, %v446
      %v451 = vsel %vm449, %v446, %v448
      %455 = vrot.lane.b32.xlu0 %v413, 124
      %v456 = vpop.permute.xlu0 %455
      %457 = vrot.lane.b32.xlu0 %v414, 124
      %v458 = vpop.permute.xlu0 %457
      %459 = vrot.lane.b32.xlu0 %v415, 124
      %v460 = vpop.permute.xlu0 %459
      %vm461 = vcmask 1014784
      %v462 = vsel %vm461, %v456, %v458
      %v463 = vsel %vm461, %v458, %v460
      %467 = vrot.lane.b32.xlu0 %v413, 108
      %v468 = vpop.permute.xlu0 %467
      %469 = vrot.lane.b32.xlu0 %v414, 108
      %v470 = vpop.permute.xlu0 %469
      %471 = vrot.lane.b32.xlu0 %v415, 108
      %v472 = vpop.permute.xlu0 %471
      %vm473 = vcmask 883712
      %v474 = vsel %vm473, %v468, %v470
      %v475 = vsel %vm473, %v470, %v472
      %479 = vrot.lane.b32.xlu0 %v413, 107
      %v480 = vpop.permute.xlu0 %479
      %481 = vrot.lane.b32.xlu0 %v414, 107
      %v482 = vpop.permute.xlu0 %481
      %483 = vrot.lane.b32.xlu0 %v415, 107
      %v484 = vpop.permute.xlu0 %483
      %vm485 = vcmask 875520
      %v486 = vsel %vm485, %v480, %v482
      %v487 = vsel %vm485, %v482, %v484
      %491 = vrot.lane.b32.xlu0 %v413, 106
      %v492 = vpop.permute.xlu0 %491
      %493 = vrot.lane.b32.xlu0 %v414, 106
      %v494 = vpop.permute.xlu0 %493
      %495 = vrot.lane.b32.xlu0 %v415, 106
      %v496 = vpop.permute.xlu0 %495
      %vm497 = vcmask 867328
      %v498 = vsel %vm497, %v492, %v494
      %v499 = vsel %vm497, %v494, %v496
      %503 = vrot.lane.b32.xlu0 %v413, 105
      %v504 = vpop.permute.xlu0 %503
      %505 = vrot.lane.b32.xlu0 %v414, 105
      %v506 = vpop.permute.xlu0 %505
      %507 = vrot.lane.b32.xlu0 %v415, 105
      %v508 = vpop.permute.xlu0 %507
      %vm509 = vcmask 859136
      %v510 = vsel %vm509, %v504, %v506
      %v511 = vsel %vm509, %v506, %v508
      %515 = vrot.lane.b32.xlu0 %v413, 104
      %v516 = vpop.permute.xlu0 %515
      %517 = vrot.lane.b32.xlu0 %v414, 104
      %v518 = vpop.permute.xlu0 %517
      %519 = vrot.lane.b32.xlu0 %v415, 104
      %v520 = vpop.permute.xlu0 %519
      %vm521 = vcmask 850944
      %v522 = vsel %vm521, %v516, %v518
      %v523 = vsel %vm521, %v518, %v520
      %527 = vrot.lane.b32.xlu0 %v413, 88
      %v528 = vpop.permute.xlu0 %527
      %529 = vrot.lane.b32.xlu0 %v414, 88
      %v530 = vpop.permute.xlu0 %529
      %531 = vrot.lane.b32.xlu0 %v415, 88
      %v532 = vpop.permute.xlu0 %531
      %vm533 = vcmask 719872
      %v534 = vsel %vm533, %v528, %v530
      %v535 = vsel %vm533, %v530, %v532
      %539 = vrot.lane.b32.xlu0 %v413, 87
      %v540 = vpop.permute.xlu0 %539
      %541 = vrot.lane.b32.xlu0 %v414, 87
      %v542 = vpop.permute.xlu0 %541
      %543 = vrot.lane.b32.xlu0 %v415, 87
      %v544 = vpop.permute.xlu0 %543
      %vm545 = vcmask 711680
      %v546 = vsel %vm545, %v540, %v542
      %v547 = vsel %vm545, %v542, %v544
      %551 = vrot.lane.b32.xlu0 %v413, 86
      %v552 = vpop.permute.xlu0 %551
      %553 = vrot.lane.b32.xlu0 %v414, 86
      %v554 = vpop.permute.xlu0 %553
      %555 = vrot.lane.b32.xlu0 %v415, 86
      %v556 = vpop.permute.xlu0 %555
      %vm557 = vcmask 703488
      %v558 = vsel %vm557, %v552, %v554
      %v559 = vsel %vm557, %v554, %v556
      %563 = vrot.lane.b32.xlu0 %v413, 85
      %v564 = vpop.permute.xlu0 %563
      %565 = vrot.lane.b32.xlu0 %v414, 85
      %v566 = vpop.permute.xlu0 %565
      %567 = vrot.lane.b32.xlu0 %v415, 85
      %v568 = vpop.permute.xlu0 %567
      %vm569 = vcmask 695296
      %v570 = vsel %vm569, %v564, %v566
      %v571 = vsel %vm569, %v566, %v568
      %575 = vrot.lane.b32.xlu0 %v413, 84
      %v576 = vpop.permute.xlu0 %575
      %577 = vrot.lane.b32.xlu0 %v414, 84
      %v578 = vpop.permute.xlu0 %577
      %579 = vrot.lane.b32.xlu0 %v415, 84
      %v580 = vpop.permute.xlu0 %579
      %vm581 = vcmask 687104
      %v582 = vsel %vm581, %v576, %v578
      %v583 = vsel %vm581, %v578, %v580
      %587 = vrot.lane.b32.xlu0 %v413, 68
      %v588 = vpop.permute.xlu0 %587
      %589 = vrot.lane.b32.xlu0 %v414, 68
      %v590 = vpop.permute.xlu0 %589
      %591 = vrot.lane.b32.xlu0 %v415, 68
      %v592 = vpop.permute.xlu0 %591
      %vm593 = vcmask 556032
      %v594 = vsel %vm593, %v588, %v590
      %v595 = vsel %vm593, %v590, %v592
      %v599 = vld [vmem:[%s327] sm:$0xff]
      %v600 = vld [vmem:[%s327 + $0x8] sm:$0xff]
      %v601 = vld [vmem:[%s327 + $0x10] sm:$0xff]
      %v602 = vld [vmem:[%s327 + $0x18] sm:$0xff]
      %v607 = vunpack.c.l.b16 %v599
      %v608 = vunpack.c.h.b16 %v599
      %v609 = vunpack.c.l.b16 %v600
      %v610 = vunpack.c.h.b16 %v600
      %v611 = vunpack.c.l.b16 %v601
      %v612 = vunpack.c.h.b16 %v601
      %v613 = vunpack.c.l.b16 %v602
      %v614 = vunpack.c.h.b16 %v602
      %v615 = vpack.c.b16 %v611, %v607
      %v616 = vpack.c.b16 %v612, %v608
      %v617 = vpack.c.b16 %v613, %v609
      %v618 = vpack.c.b16 %v614, %v610
      %619 = vrot.lane.b32.xlu0 %v615, 109
      %v620 = vpop.permute.xlu0 %619
      %621 = vrot.lane.b32.xlu0 %v616, 109
      %v622 = vpop.permute.xlu0 %621
      %623 = vrot.lane.b32.xlu0 %v617, 109
      %v624 = vpop.permute.xlu0 %623
      %625 = vrot.lane.b32.xlu0 %v618, 109
      %v626 = vpop.permute.xlu0 %625
      %vm627 = vcmask 891904
      %v628 = vsel %vm627, %v620, %v622
      %v629 = vsel %vm627, %v622, %v624
      %v630 = vsel %vm627, %v624, %v626
      %631 = vrot.lane.b32.xlu0 %v615, 108
      %v632 = vpop.permute.xlu0 %631
      %633 = vrot.lane.b32.xlu0 %v616, 108
      %v634 = vpop.permute.xlu0 %633
      %635 = vrot.lane.b32.xlu0 %v617, 108
      %v636 = vpop.permute.xlu0 %635
      %637 = vrot.lane.b32.xlu0 %v618, 108
      %v638 = vpop.permute.xlu0 %637
      %v639 = vsel %vm473, %v632, %v634
      %v640 = vsel %vm473, %v634, %v636
      %v641 = vsel %vm473, %v636, %v638
      %642 = vrot.lane.b32.xlu0 %v615, 107
      %v643 = vpop.permute.xlu0 %642
      %644 = vrot.lane.b32.xlu0 %v616, 107
      %v645 = vpop.permute.xlu0 %644
      %646 = vrot.lane.b32.xlu0 %v617, 107
      %v647 = vpop.permute.xlu0 %646
      %648 = vrot.lane.b32.xlu0 %v618, 107
      %v649 = vpop.permute.xlu0 %648
      %v650 = vsel %vm485, %v643, %v645
      %v651 = vsel %vm485, %v645, %v647
      %v652 = vsel %vm485, %v647, %v649
      %653 = vrot.lane.b32.xlu0 %v615, 106
      %v654 = vpop.permute.xlu0 %653
      %655 = vrot.lane.b32.xlu0 %v616, 106
      %v656 = vpop.permute.xlu0 %655
      %657 = vrot.lane.b32.xlu0 %v617, 106
      %v658 = vpop.permute.xlu0 %657
      %659 = vrot.lane.b32.xlu0 %v618, 106
      %v660 = vpop.permute.xlu0 %659
      %v661 = vsel %vm497, %v654, %v656
      %v662 = vsel %vm497, %v656, %v658
      %v663 = vsel %vm497, %v658, %v660
      %664 = vrot.lane.b32.xlu0 %v615, 105
      %v665 = vpop.permute.xlu0 %664
      %666 = vrot.lane.b32.xlu0 %v616, 105
      %v667 = vpop.permute.xlu0 %666
      %668 = vrot.lane.b32.xlu0 %v617, 105
      %v669 = vpop.permute.xlu0 %668
      %670 = vrot.lane.b32.xlu0 %v618, 105
      %v671 = vpop.permute.xlu0 %670
      %v672 = vsel %vm509, %v665, %v667
      %v673 = vsel %vm509, %v667, %v669
      %v674 = vsel %vm509, %v669, %v671
      %v677 = vunpack.c.l.b16 %v394
      %v678 = vunpack.c.h.b16 %v394
      %v679 = vunpack.c.l.b16 %v396
      %v680 = vunpack.c.h.b16 %v396
      %v681 = vpack.c.b16 %v679, %v677
      %v682 = vpack.c.b16 %v680, %v678
      %684 = vrot.lane.b32.xlu0 %v413, 67
      %v685 = vpop.permute.xlu0 %684
      %686 = vrot.lane.b32.xlu0 %v414, 67
      %v687 = vpop.permute.xlu0 %686
      %688 = vrot.lane.b32.xlu0 %v415, 67
      %v689 = vpop.permute.xlu0 %688
      %690 = vrot.lane.b32.xlu0 %v426, 67
      %v691 = vpop.permute.xlu0 %690
      %692 = vrot.lane.b32.xlu0 %v427, 67
      %v693 = vpop.permute.xlu0 %692
      %694 = vrot.lane.b32.xlu0 %v424, 67
      %v695 = vpop.permute.xlu0 %694
      %696 = vrot.lane.b32.xlu0 %v438, 67
      %v697 = vpop.permute.xlu0 %696
      %698 = vrot.lane.b32.xlu0 %v439, 67
      %v699 = vpop.permute.xlu0 %698
      %700 = vrot.lane.b32.xlu0 %v436, 67
      %v701 = vpop.permute.xlu0 %700
      %702 = vrot.lane.b32.xlu0 %v450, 67
      %v703 = vpop.permute.xlu0 %702
      %704 = vrot.lane.b32.xlu0 %v451, 67
      %v705 = vpop.permute.xlu0 %704
      %706 = vrot.lane.b32.xlu0 %v448, 67
      %v707 = vpop.permute.xlu0 %706
      %708 = vrot.lane.b32.xlu0 %v628, 67
      %v709 = vpop.permute.xlu0 %708
      %710 = vrot.lane.b32.xlu0 %v629, 67
      %v711 = vpop.permute.xlu0 %710
      %712 = vrot.lane.b32.xlu0 %v630, 67
      %v713 = vpop.permute.xlu0 %712
      %714 = vrot.lane.b32.xlu0 %v639, 67
      %v715 = vpop.permute.xlu0 %714
      %716 = vrot.lane.b32.xlu0 %v640, 67
      %v717 = vpop.permute.xlu0 %716
      %718 = vrot.lane.b32.xlu0 %v641, 67
      %v719 = vpop.permute.xlu0 %718
      %720 = vrot.lane.b32.xlu0 %v650, 67
      %v721 = vpop.permute.xlu0 %720
      %722 = vrot.lane.b32.xlu0 %v651, 67
      %v723 = vpop.permute.xlu0 %722
      %724 = vrot.lane.b32.xlu0 %v652, 67
      %v725 = vpop.permute.xlu0 %724
      %726 = vrot.lane.b32.xlu0 %v661, 67
      %v727 = vpop.permute.xlu0 %726
      %728 = vrot.lane.b32.xlu0 %v662, 67
      %v729 = vpop.permute.xlu0 %728
      %730 = vrot.lane.b32.xlu0 %v663, 67
      %v731 = vpop.permute.xlu0 %730
      %732 = vrot.lane.b32.xlu0 %v672, 67
      %v733 = vpop.permute.xlu0 %732
      %734 = vrot.lane.b32.xlu0 %v673, 67
      %v735 = vpop.permute.xlu0 %734
      %736 = vrot.lane.b32.xlu0 %v674, 67
      %v737 = vpop.permute.xlu0 %736
      %vm738 = vcmask 547840
      %v739 = vsel %vm738, %v685, %v687
      %v740 = vsel %vm738, %v687, %v689
      %v741 = vsel %vm738, %v691, %v693
      %v742 = vsel %vm738, %v693, %v695
      %v743 = vsel %vm738, %v697, %v699
      %v744 = vsel %vm738, %v699, %v701
      %v745 = vsel %vm738, %v703, %v705
      %v746 = vsel %vm738, %v705, %v707
      %v747 = vsel %vm738, %v709, %v711
      %v748 = vsel %vm738, %v711, %v713
      %v749 = vsel %vm738, %v715, %v717
      %v750 = vsel %vm738, %v717, %v719
      %v751 = vsel %vm738, %v721, %v723
      %v752 = vsel %vm738, %v723, %v725
      %v753 = vsel %vm738, %v727, %v729
      %v754 = vsel %vm738, %v729, %v731
      %v755 = vsel %vm738, %v733, %v735
      %v756 = vsel %vm738, %v735, %v737
      %vm784 = vcmask 130048
      %v786 = vsel %vm784, %v682, 0
      %788 = vmatprep.subr.bf16.mxu0 %v740
      %789 = vmatpush1.bf16.msra.mxu0 %v739
      %790 = vmatprep.subr.bf16.mxu0 %v742
      %791 = vmatpush1.bf16.msra.mxu0 %v741
      %792 = vmatprep.subr.bf16.mxu0 %v744
      %793 = vmatpush1.bf16.msra.mxu0 %v743
      %794 = vmatprep.subr.bf16.mxu0 %v746
      %795 = vmatpush1.bf16.msra.mxu0 %v745
      %796 = vmatprep.subr.bf16.mxu0 %v748
      %797 = vmatpush1.bf16.msra.mxu0 %v747
      %798 = vmatprep.subr.bf16.mxu0 %v750
      %799 = vmatpush1.bf16.msra.mxu0 %v749
      %800 = vmatprep.subr.bf16.mxu0 %v752
      %801 = vmatpush1.bf16.msra.mxu0 %v751
      %802 = vmatprep.subr.bf16.mxu0 %v754
      %803 = vmatpush1.bf16.msra.mxu0 %v753
      %804 = vmatprep.subr.bf16.mxu0 %v756
      %805 = vmatpush1.bf16.msra.mxu0 %v755
      %806 = vmatprep.subr.bf16.mxu0 0
      %807 = vmatpush1.bf16.msra.mxu0 0
      %808 = vmatprep.subr.bf16.mxu0 0
      %809 = vmatpush1.bf16.msra.mxu0 0
      %810 = vmatprep.subr.bf16.mxu0 0
      %811 = vmatpush1.bf16.msra.mxu0 0
      %812 = vmatprep.subr.bf16.mxu0 0
      %813 = vmatpush1.bf16.msra.mxu0 0
      %814 = vmatprep.subr.bf16.mxu0 0
      %815 = vmatpush1.bf16.msra.mxu0 0
      %816 = vmatprep.subr.bf16.mxu0 0
      %817 = vmatpush1.bf16.msra.mxu0 0
      %818 = vmatprep.subr.bf16.mxu0 0
      %819 = vmatpush1.bf16.msra.mxu0 0
      %820 = vmatprep.mubr.bf16.mxu0 %v786
      %821 = vmatmul.mubr.bf16.gmra.mrb[0].mxu0 %v681
      %v822 = vpop.f32.mrb[0].mxu0
      %v823 = vadd.f32 0.0, %v822
      %v824 = vpop.f32.mrb[0].mxu0
      %v825 = vadd.f32 0.0, %v824
      %v826 = vpop.f32.mrb[0].mxu0
      %v827 = vadd.f32 0.0, %v826
      %v828 = vpop.f32.mrb[0].mxu0
      %v829 = vadd.f32 0.0, %v828
      %830 = vdwg.mxu0
      %831 = vmatprep.subr.bf16.mxu0 0
      %832 = vmatpush1.bf16.msra.mxu0 %v689
      %833 = vmatprep.subr.bf16.mxu0 0
      %834 = vmatpush1.bf16.msra.mxu0 %v695
      %835 = vmatprep.subr.bf16.mxu0 0
      %836 = vmatpush1.bf16.msra.mxu0 %v701
      %837 = vmatprep.subr.bf16.mxu0 0
      %838 = vmatpush1.bf16.msra.mxu0 %v707
      %839 = vmatprep.subr.bf16.mxu0 0
      %840 = vmatpush1.bf16.msra.mxu0 %v713
      %841 = vmatprep.subr.bf16.mxu0 0
      %842 = vmatpush1.bf16.msra.mxu0 %v719
      %843 = vmatprep.subr.bf16.mxu0 0
      %844 = vmatpush1.bf16.msra.mxu0 %v725
      %845 = vmatprep.subr.bf16.mxu0 0
      %846 = vmatpush1.bf16.msra.mxu0 %v731
      %847 = vmatprep.subr.bf16.mxu0 0
      %848 = vmatpush1.bf16.msra.mxu0 %v737
      %849 = vmatprep.subr.bf16.mxu0 0
      %850 = vmatpush1.bf16.msra.mxu0 0
      %851 = vmatprep.subr.bf16.mxu0 0
      %852 = vmatpush1.bf16.msra.mxu0 0
      %853 = vmatprep.subr.bf16.mxu0 0
      %854 = vmatpush1.bf16.msra.mxu0 0
      %855 = vmatprep.subr.bf16.mxu0 0
      %856 = vmatpush1.bf16.msra.mxu0 0
      %857 = vmatprep.subr.bf16.mxu0 0
      %858 = vmatpush1.bf16.msra.mxu0 0
      %859 = vmatprep.subr.bf16.mxu0 0
      %860 = vmatpush1.bf16.msra.mxu0 0
      %861 = vmatprep.subr.bf16.mxu0 0
      %862 = vmatpush1.bf16.msra.mxu0 0
      %863 = vmatprep.mubr.bf16.mxu0 %v786
      %864 = vmatmul.mubr.bf16.gmra.mrb[0].mxu0 %v681
      %v865 = vpop.f32.mrb[0].mxu0
      %v866 = vadd.f32 0.0, %v865
      %v867 = vpop.f32.mrb[0].mxu0
      %v868 = vpop.f32.mrb[0].mxu0
      %v869 = vadd.f32 0.0, %v868
      %v870 = vpop.f32.mrb[0].mxu0
      %871 = vdwg.mxu0
      %v874 = vunpack.c.l.b16 %v393
      %v875 = vunpack.c.h.b16 %v393
      %v876 = vunpack.c.l.b16 %v395
      %v877 = vunpack.c.h.b16 %v395
      %v878 = vpack.c.b16 %v876, %v874
      %v879 = vpack.c.b16 %v877, %v875
      %882 = vmatprep.subr.bf16.mxu0 %v414
      %883 = vmatpush1.bf16.msra.mxu0 %v413
      %884 = vmatprep.subr.bf16.mxu0 %v427
      %885 = vmatpush1.bf16.msra.mxu0 %v426
      %886 = vmatprep.subr.bf16.mxu0 %v439
      %887 = vmatpush1.bf16.msra.mxu0 %v438
      %888 = vmatprep.subr.bf16.mxu0 %v451
      %889 = vmatpush1.bf16.msra.mxu0 %v450
      %890 = vmatprep.subr.bf16.mxu0 %v463
      %891 = vmatpush1.bf16.msra.mxu0 %v462
      %892 = vmatprep.subr.bf16.mxu0 %v475
      %893 = vmatpush1.bf16.msra.mxu0 %v474
      %894 = vmatprep.subr.bf16.mxu0 %v487
      %895 = vmatpush1.bf16.msra.mxu0 %v486
      %896 = vmatprep.subr.bf16.mxu0 %v499
      %897 = vmatpush1.bf16.msra.mxu0 %v498
      %898 = vmatprep.subr.bf16.mxu0 %v511
      %899 = vmatpush1.bf16.msra.mxu0 %v510
      %900 = vmatprep.subr.bf16.mxu0 %v523
      %901 = vmatpush1.bf16.msra.mxu0 %v522
      %902 = vmatprep.subr.bf16.mxu0 %v535
      %903 = vmatpush1.bf16.msra.mxu0 %v534
      %904 = vmatprep.subr.bf16.mxu0 %v547
      %905 = vmatpush1.bf16.msra.mxu0 %v546
      %906 = vmatprep.subr.bf16.mxu0 %v559
      %907 = vmatpush1.bf16.msra.mxu0 %v558
      %908 = vmatprep.subr.bf16.mxu0 %v571
      %909 = vmatpush1.bf16.msra.mxu0 %v570
      %910 = vmatprep.subr.bf16.mxu0 %v583
      %911 = vmatpush1.bf16.msra.mxu0 %v582
      %912 = vmatprep.subr.bf16.mxu0 %v595
      %913 = vmatpush1.bf16.msra.mxu0 %v594
      %914 = vmatprep.mubr.bf16.mxu0 %v879
      %915 = vmatmul.mubr.bf16.gmra.mrb[0].mxu0 %v878
      %v916 = vpop.f32.mrb[0].mxu0
      %v917 = vadd.f32 %v823, %v916
      %v918 = vpop.f32.mrb[0].mxu0
      %v919 = vadd.f32 %v825, %v918
      %v920 = vpop.f32.mrb[0].mxu0
      %v921 = vadd.f32 %v827, %v920
      %v922 = vpop.f32.mrb[0].mxu0
      %v923 = vadd.f32 %v829, %v922
      %924 = vdwg.mxu0
      %925 = vmatprep.subr.bf16.mxu0 0
      %926 = vmatpush1.bf16.msra.mxu0 %v415
      %927 = vmatprep.subr.bf16.mxu0 0
      %928 = vmatpush1.bf16.msra.mxu0 %v424
      %929 = vmatprep.subr.bf16.mxu0 0
      %930 = vmatpush1.bf16.msra.mxu0 %v436
      %931 = vmatprep.subr.bf16.mxu0 0
      %932 = vmatpush1.bf16.msra.mxu0 %v448
      %933 = vmatprep.subr.bf16.mxu0 0
      %934 = vmatpush1.bf16.msra.mxu0 %v460
      %935 = vmatprep.subr.bf16.mxu0 0
      %936 = vmatpush1.bf16.msra.mxu0 %v472
      %937 = vmatprep.subr.bf16.mxu0 0
      %938 = vmatpush1.bf16.msra.mxu0 %v484
      %939 = vmatprep.subr.bf16.mxu0 0
      %940 = vmatpush1.bf16.msra.mxu0 %v496
      %941 = vmatprep.subr.bf16.mxu0 0
      %942 = vmatpush1.bf16.msra.mxu0 %v508
      %943 = vmatprep.subr.bf16.mxu0 0
      %944 = vmatpush1.bf16.msra.mxu0 %v520
      %945 = vmatprep.subr.bf16.mxu0 0
      %946 = vmatpush1.bf16.msra.mxu0 %v532
      %947 = vmatprep.subr.bf16.mxu0 0
      %948 = vmatpush1.bf16.msra.mxu0 %v544
      %949 = vmatprep.subr.bf16.mxu0 0
      %950 = vmatpush1.bf16.msra.mxu0 %v556
      %951 = vmatprep.subr.bf16.mxu0 0
      %952 = vmatpush1.bf16.msra.mxu0 %v568
      %953 = vmatprep.subr.bf16.mxu0 0
      %954 = vmatpush1.bf16.msra.mxu0 %v580
      %955 = vmatprep.subr.bf16.mxu0 0
      %956 = vmatpush1.bf16.msra.mxu0 %v592
      %957 = vmatprep.mubr.bf16.mxu0 %v879
      %958 = vmatmul.mubr.bf16.gmra.mrb[0].mxu0 %v878
      %v959 = vpop.f32.mrb[0].mxu0
      %v960 = vadd.f32 %v866, %v959
      %v961 = vpop.f32.mrb[0].mxu0
      %v962 = vpop.f32.mrb[0].mxu0
      %v963 = vadd.f32 %v869, %v962
      %v964 = vpop.f32.mrb[0].mxu0
      %965 = vdwg.mxu0
      %967 = vset.pattern.permute.xlu0 0
      %968 = vperm.xlu0 %967, %v397
      %v969 = vpop.permute.xlu0 %968
      %972 = vset.pattern.permute.xlu0 0
      %973 = vperm.xlu0 %972, %v398
      %v974 = vpop.permute.xlu0 %973
      %v976 = vadd.f32 %v917, %v969
      %v977 = vadd.f32 %v919, %v969
      %v978 = vadd.f32 %v960, %v969
      %v979 = vadd.f32 %v921, %v974
      %v980 = vadd.f32 %v923, %v974
      %v981 = vadd.f32 %v963, %v974
      loop: start=0, step=1, limit=2
      $region57: #{resnet_con_forward.1} parent=55 // loop_pre_header
        _
      $region58: #{resnet_con_forward.1} parent=55 // loop_header
        %s983 = sphi 0, %s987
        %p984 = scmp.ge.s32.totalorder %s983, 2
        %v988 = vphi %v976, %v2165
        %v989 = vphi %v977, %v2166
        %v990 = vphi %v978, %v2167
        %v991 = vphi %v979, %v2168
        %v992 = vphi %v980, %v2169
        %v993 = vphi %v981, %v2170
      $region59: #{resnet_con_forward.1} parent=55 // loop_header_branch
        %986 = sbr.rel (%p984) target = $region63
      $region60: #{resnet_con_forward.1} parent=55 // loop_body
        %s994 = smul.u32 %s983, 8
        %s995 = smul.addr %s994, 4
        %s996 = scalar_lea.vmem %s3, %s995
        %v997 = vld [vmem:[%s996] sm:$0xff]
        %v998 = vld [vmem:[%s996 + $0x8] sm:$0xff]
        %v999 = vld [vmem:[%s996 + $0x10] sm:$0xff]
        %v1000 = vld [vmem:[%s996 + $0x18] sm:$0xff]
        %s1001 = smul.u32 %s983, 16
        %s1002 = scalar_lea.vmem %s4, %s1001
        %v1003 = vld [vmem:[%s1002] sm:$0xff]
        %v1004 = vld [vmem:[%s1002 + $0x8] sm:$0xff]
        %v1005 = vmax.f32 %v988, 0.0
        %v1006 = vmax.f32 %v989, 0.0
        %v1007 = vmax.f32 %v990, 0.0
        %v1008 = vmax.f32 %v991, 0.0
        %v1009 = vmax.f32 %v992, 0.0
        %v1010 = vmax.f32 %v993, 0.0
        %v1011 = vsel %vm386, 1, 0
        %v1012 = vsel %vm387, 1, 0
        %v1013 = vsel %vm388, 1, 0
        %vm1014 = vcmp.eq.s32.totalorder %v1011, 1
        %vm1015 = vcmp.eq.s32.totalorder %v1012, 1
        %vm1016 = vcmp.eq.s32.totalorder %v1013, 1
        %v1017 = vsel %vm1014, %v1005, 0.0
        %v1018 = vsel %vm1015, %v1006, 0.0
        %v1019 = vsel %vm1016, %v1007, 0.0
        %v1020 = vsel %vm1014, %v1008, 0.0
        %v1021 = vsel %vm1015, %v1009, 0.0
        %v1022 = vsel %vm1016, %v1010, 0.0
        %v1023 = vpack.c.bf16 %v1020, %v1017
        %v1024 = vpack.c.bf16 %v1021, %v1018
        %v1025 = vpack.c.bf16 %v1022, %v1019
        %1029 = vrot.lane.b32.xlu0 %v1023, 42
        %v1030 = vpop.permute.xlu0 %1029
        %1031 = vrot.lane.b32.xlu0 %v1024, 42
        %v1032 = vpop.permute.xlu0 %1031
        %1033 = vrot.lane.b32.xlu0 %v1025, 42
        %v1034 = vpop.permute.xlu0 %1033
        %vm1035 = vcmask 343040
        %v1036 = vsel %vm1035, %v1030, %v1032
        %v1037 = vsel %vm1035, %v1032, %v1034
        %vm1041 = vcmask 1047888
        %1042 = vst.msk [vmem:[#allocation2] sm:$0xff] %vm1041, %v1030
        %1043 = vst [vmem:[#allocation2 + $0x8] sm:$0xff] %v1036
        %vm1044 = vcmask 867328
        %1045 = vst.msk [vmem:[#allocation2 + $0x10] sm:$0xff] %vm1044, %v1037
        %v1046 = vld [vmem:[#allocation2] sm:$0xff]
        %v1047 = vld [vmem:[#allocation2 + $0x8] sm:$0xff]
        %v1048 = vld [vmem:[#allocation2 + $0x10] sm:$0xff]
        %1052 = vrot.lane.b32.xlu0 %v1046, 127
        %v1053 = vpop.permute.xlu0 %1052
        %1054 = vrot.lane.b32.xlu0 %v1047, 127
        %v1055 = vpop.permute.xlu0 %1054
        %1056 = vrot.lane.b32.xlu0 %v1048, 127
        %v1057 = vpop.permute.xlu0 %1056
        %v1058 = vsel %vm425, %v1053, %v1055
        %v1059 = vsel %vm425, %v1055, %v1057
        %1063 = vrot.lane.b32.xlu0 %v1046, 126
        %v1064 = vpop.permute.xlu0 %1063
        %1065 = vrot.lane.b32.xlu0 %v1047, 126
        %v1066 = vpop.permute.xlu0 %1065
        %1067 = vrot.lane.b32.xlu0 %v1048, 126
        %v1068 = vpop.permute.xlu0 %1067
        %v1069 = vsel %vm437, %v1064, %v1066
        %v1070 = vsel %vm437, %v1066, %v1068
        %1074 = vrot.lane.b32.xlu0 %v1046, 125
        %v1075 = vpop.permute.xlu0 %1074
        %1076 = vrot.lane.b32.xlu0 %v1047, 125
        %v1077 = vpop.permute.xlu0 %1076
        %1078 = vrot.lane.b32.xlu0 %v1048, 125
        %v1079 = vpop.permute.xlu0 %1078
        %v1080 = vsel %vm449, %v1075, %v1077
        %v1081 = vsel %vm449, %v1077, %v1079
        %1085 = vrot.lane.b32.xlu0 %v1046, 124
        %v1086 = vpop.permute.xlu0 %1085
        %1087 = vrot.lane.b32.xlu0 %v1047, 124
        %v1088 = vpop.permute.xlu0 %1087
        %1089 = vrot.lane.b32.xlu0 %v1048, 124
        %v1090 = vpop.permute.xlu0 %1089
        %v1091 = vsel %vm461, %v1086, %v1088
        %v1092 = vsel %vm461, %v1088, %v1090
        %1096 = vrot.lane.b32.xlu0 %v1046, 108
        %v1097 = vpop.permute.xlu0 %1096
        %1098 = vrot.lane.b32.xlu0 %v1047, 108
        %v1099 = vpop.permute.xlu0 %1098
        %1100 = vrot.lane.b32.xlu0 %v1048, 108
        %v1101 = vpop.permute.xlu0 %1100
        %v1102 = vsel %vm473, %v1097, %v1099
        %v1103 = vsel %vm473, %v1099, %v1101
        %1107 = vrot.lane.b32.xlu0 %v1046, 107
        %v1108 = vpop.permute.xlu0 %1107
        %1109 = vrot.lane.b32.xlu0 %v1047, 107
        %v1110 = vpop.permute.xlu0 %1109
        %1111 = vrot.lane.b32.xlu0 %v1048, 107
        %v1112 = vpop.permute.xlu0 %1111
        %v1113 = vsel %vm485, %v1108, %v1110
        %v1114 = vsel %vm485, %v1110, %v1112
        %1118 = vrot.lane.b32.xlu0 %v1046, 106
        %v1119 = vpop.permute.xlu0 %1118
        %1120 = vrot.lane.b32.xlu0 %v1047, 106
        %v1121 = vpop.permute.xlu0 %1120
        %1122 = vrot.lane.b32.xlu0 %v1048, 106
        %v1123 = vpop.permute.xlu0 %1122
        %v1124 = vsel %vm497, %v1119, %v1121
        %v1125 = vsel %vm497, %v1121, %v1123
        %1129 = vrot.lane.b32.xlu0 %v1046, 105
        %v1130 = vpop.permute.xlu0 %1129
        %1131 = vrot.lane.b32.xlu0 %v1047, 105
        %v1132 = vpop.permute.xlu0 %1131
        %1133 = vrot.lane.b32.xlu0 %v1048, 105
        %v1134 = vpop.permute.xlu0 %1133
        %v1135 = vsel %vm509, %v1130, %v1132
        %v1136 = vsel %vm509, %v1132, %v1134
        %1140 = vrot.lane.b32.xlu0 %v1046, 104
        %v1141 = vpop.permute.xlu0 %1140
        %1142 = vrot.lane.b32.xlu0 %v1047, 104
        %v1143 = vpop.permute.xlu0 %1142
        %1144 = vrot.lane.b32.xlu0 %v1048, 104
        %v1145 = vpop.permute.xlu0 %1144
        %v1146 = vsel %vm521, %v1141, %v1143
        %v1147 = vsel %vm521, %v1143, %v1145
        %1151 = vrot.lane.b32.xlu0 %v1046, 88
        %v1152 = vpop.permute.xlu0 %1151
        %1153 = vrot.lane.b32.xlu0 %v1047, 88
        %v1154 = vpop.permute.xlu0 %1153
        %1155 = vrot.lane.b32.xlu0 %v1048, 88
        %v1156 = vpop.permute.xlu0 %1155
        %v1157 = vsel %vm533, %v1152, %v1154
        %v1158 = vsel %vm533, %v1154, %v1156
        %1162 = vrot.lane.b32.xlu0 %v1046, 87
        %v1163 = vpop.permute.xlu0 %1162
        %1164 = vrot.lane.b32.xlu0 %v1047, 87
        %v1165 = vpop.permute.xlu0 %1164
        %1166 = vrot.lane.b32.xlu0 %v1048, 87
        %v1167 = vpop.permute.xlu0 %1166
        %v1168 = vsel %vm545, %v1163, %v1165
        %v1169 = vsel %vm545, %v1165, %v1167
        %1173 = vrot.lane.b32.xlu0 %v1046, 86
        %v1174 = vpop.permute.xlu0 %1173
        %1175 = vrot.lane.b32.xlu0 %v1047, 86
        %v1176 = vpop.permute.xlu0 %1175
        %1177 = vrot.lane.b32.xlu0 %v1048, 86
        %v1178 = vpop.permute.xlu0 %1177
        %v1179 = vsel %vm557, %v1174, %v1176
        %v1180 = vsel %vm557, %v1176, %v1178
        %1184 = vrot.lane.b32.xlu0 %v1046, 85
        %v1185 = vpop.permute.xlu0 %1184
        %1186 = vrot.lane.b32.xlu0 %v1047, 85
        %v1187 = vpop.permute.xlu0 %1186
        %1188 = vrot.lane.b32.xlu0 %v1048, 85
        %v1189 = vpop.permute.xlu0 %1188
        %v1190 = vsel %vm569, %v1185, %v1187
        %v1191 = vsel %vm569, %v1187, %v1189
        %1195 = vrot.lane.b32.xlu0 %v1046, 84
        %v1196 = vpop.permute.xlu0 %1195
        %1197 = vrot.lane.b32.xlu0 %v1047, 84
        %v1198 = vpop.permute.xlu0 %1197
        %1199 = vrot.lane.b32.xlu0 %v1048, 84
        %v1200 = vpop.permute.xlu0 %1199
        %v1201 = vsel %vm581, %v1196, %v1198
        %v1202 = vsel %vm581, %v1198, %v1200
        %1206 = vrot.lane.b32.xlu0 %v1046, 68
        %v1207 = vpop.permute.xlu0 %1206
        %1208 = vrot.lane.b32.xlu0 %v1047, 68
        %v1209 = vpop.permute.xlu0 %1208
        %1210 = vrot.lane.b32.xlu0 %v1048, 68
        %v1211 = vpop.permute.xlu0 %1210
        %v1212 = vsel %vm593, %v1207, %v1209
        %v1213 = vsel %vm593, %v1209, %v1211
        %v1217 = vld [vmem:[#allocation2] sm:$0xff]
        %v1218 = vld [vmem:[#allocation2 + $0x8] sm:$0xff]
        %v1219 = vld [vmem:[#allocation2 + $0x10] sm:$0xff]
        %v1220 = vld [vmem:[#allocation2 + $0x18] sm:$0xff]
        %1225 = vrot.lane.b32.xlu0 %v1217, 109
        %v1226 = vpop.permute.xlu0 %1225
        %1227 = vrot.lane.b32.xlu0 %v1218, 109
        %v1228 = vpop.permute.xlu0 %1227
        %1229 = vrot.lane.b32.xlu0 %v1219, 109
        %v1230 = vpop.permute.xlu0 %1229
        %1231 = vrot.lane.b32.xlu0 %v1220, 109
        %v1232 = vpop.permute.xlu0 %1231
        %v1233 = vsel %vm627, %v1226, %v1228
        %v1234 = vsel %vm627, %v1228, %v1230
        %v1235 = vsel %vm627, %v1230, %v1232
        %1236 = vrot.lane.b32.xlu0 %v1217, 108
        %v1237 = vpop.permute.xlu0 %1236
        %1238 = vrot.lane.b32.xlu0 %v1218, 108
        %v1239 = vpop.permute.xlu0 %1238
        %1240 = vrot.lane.b32.xlu0 %v1219, 108
        %v1241 = vpop.permute.xlu0 %1240
        %1242 = vrot.lane.b32.xlu0 %v1220, 108
        %v1243 = vpop.permute.xlu0 %1242
        %v1244 = vsel %vm473, %v1237, %v1239
        %v1245 = vsel %vm473, %v1239, %v1241
        %v1246 = vsel %vm473, %v1241, %v1243
        %1247 = vrot.lane.b32.xlu0 %v1217, 107
        %v1248 = vpop.permute.xlu0 %1247
        %1249 = vrot.lane.b32.xlu0 %v1218, 107
        %v1250 = vpop.permute.xlu0 %1249
        %1251 = vrot.lane.b32.xlu0 %v1219, 107
        %v1252 = vpop.permute.xlu0 %1251
        %1253 = vrot.lane.b32.xlu0 %v1220, 107
        %v1254 = vpop.permute.xlu0 %1253
        %v1255 = vsel %vm485, %v1248, %v1250
        %v1256 = vsel %vm485, %v1250, %v1252
        %v1257 = vsel %vm485, %v1252, %v1254
        %1258 = vrot.lane.b32.xlu0 %v1217, 106
        %v1259 = vpop.permute.xlu0 %1258
        %1260 = vrot.lane.b32.xlu0 %v1218, 106
        %v1261 = vpop.permute.xlu0 %1260
        %1262 = vrot.lane.b32.xlu0 %v1219, 106
        %v1263 = vpop.permute.xlu0 %1262
        %1264 = vrot.lane.b32.xlu0 %v1220, 106
        %v1265 = vpop.permute.xlu0 %1264
        %v1266 = vsel %vm497, %v1259, %v1261
        %v1267 = vsel %vm497, %v1261, %v1263
        %v1268 = vsel %vm497, %v1263, %v1265
        %1269 = vrot.lane.b32.xlu0 %v1217, 105
        %v1270 = vpop.permute.xlu0 %1269
        %1271 = vrot.lane.b32.xlu0 %v1218, 105
        %v1272 = vpop.permute.xlu0 %1271
        %1273 = vrot.lane.b32.xlu0 %v1219, 105
        %v1274 = vpop.permute.xlu0 %1273
        %1275 = vrot.lane.b32.xlu0 %v1220, 105
        %v1276 = vpop.permute.xlu0 %1275
        %v1277 = vsel %vm509, %v1270, %v1272
        %v1278 = vsel %vm509, %v1272, %v1274
        %v1279 = vsel %vm509, %v1274, %v1276
        %v1282 = vunpack.c.l.b16 %v998
        %v1283 = vunpack.c.h.b16 %v998
        %v1284 = vunpack.c.l.b16 %v1000
        %v1285 = vunpack.c.h.b16 %v1000
        %v1286 = vpack.c.b16 %v1284, %v1282
        %v1287 = vpack.c.b16 %v1285, %v1283
        %1289 = vrot.lane.b32.xlu0 %v1046, 67
        %v1290 = vpop.permute.xlu0 %1289
        %1291 = vrot.lane.b32.xlu0 %v1047, 67
        %v1292 = vpop.permute.xlu0 %1291
        %1293 = vrot.lane.b32.xlu0 %v1048, 67
        %v1294 = vpop.permute.xlu0 %1293
        %1295 = vrot.lane.b32.xlu0 %v1058, 67
        %v1296 = vpop.permute.xlu0 %1295
        %1297 = vrot.lane.b32.xlu0 %v1059, 67
        %v1298 = vpop.permute.xlu0 %1297
        %1299 = vrot.lane.b32.xlu0 %v1057, 67
        %v1300 = vpop.permute.xlu0 %1299
        %1301 = vrot.lane.b32.xlu0 %v1069, 67
        %v1302 = vpop.permute.xlu0 %1301
        %1303 = vrot.lane.b32.xlu0 %v1070, 67
        %v1304 = vpop.permute.xlu0 %1303
        %1305 = vrot.lane.b32.xlu0 %v1068, 67
        %v1306 = vpop.permute.xlu0 %1305
        %1307 = vrot.lane.b32.xlu0 %v1080, 67
        %v1308 = vpop.permute.xlu0 %1307
        %1309 = vrot.lane.b32.xlu0 %v1081, 67
        %v1310 = vpop.permute.xlu0 %1309
        %1311 = vrot.lane.b32.xlu0 %v1079, 67
        %v1312 = vpop.permute.xlu0 %1311
        %1313 = vrot.lane.b32.xlu0 %v1233, 67
        %v1314 = vpop.permute.xlu0 %1313
        %1315 = vrot.lane.b32.xlu0 %v1234, 67
        %v1316 = vpop.permute.xlu0 %1315
        %1317 = vrot.lane.b32.xlu0 %v1235, 67
        %v1318 = vpop.permute.xlu0 %1317
        %1319 = vrot.lane.b32.xlu0 %v1244, 67
        %v1320 = vpop.permute.xlu0 %1319
        %1321 = vrot.lane.b32.xlu0 %v1245, 67
        %v1322 = vpop.permute.xlu0 %1321
        %1323 = vrot.lane.b32.xlu0 %v1246, 67
        %v1324 = vpop.permute.xlu0 %1323
        %1325 = vrot.lane.b32.xlu0 %v1255, 67
        %v1326 = vpop.permute.xlu0 %1325
        %1327 = vrot.lane.b32.xlu0 %v1256, 67
        %v1328 = vpop.permute.xlu0 %1327
        %1329 = vrot.lane.b32.xlu0 %v1257, 67
        %v1330 = vpop.permute.xlu0 %1329
        %1331 = vrot.lane.b32.xlu0 %v1266, 67
        %v1332 = vpop.permute.xlu0 %1331
        %1333 = vrot.lane.b32.xlu0 %v1267, 67
        %v1334 = vpop.permute.xlu0 %1333
        %1335 = vrot.lane.b32.xlu0 %v1268, 67
        %v1336 = vpop.permute.xlu0 %1335
        %1337 = vrot.lane.b32.xlu0 %v1277, 67
        %v1338 = vpop.permute.xlu0 %1337
        %1339 = vrot.lane.b32.xlu0 %v1278, 67
        %v1340 = vpop.permute.xlu0 %1339
        %1341 = vrot.lane.b32.xlu0 %v1279, 67
        %v1342 = vpop.permute.xlu0 %1341
        %v1343 = vsel %vm738, %v1290, %v1292
        %v1344 = vsel %vm738, %v1292, %v1294
        %v1345 = vsel %vm738, %v1296, %v1298
        %v1346 = vsel %vm738, %v1298, %v1300
        %v1347 = vsel %vm738, %v1302, %v1304
        %v1348 = vsel %vm738, %v1304, %v1306
        %v1349 = vsel %vm738, %v1308, %v1310
        %v1350 = vsel %vm738, %v1310, %v1312
        %v1351 = vsel %vm738, %v1314, %v1316
        %v1352 = vsel %vm738, %v1316, %v1318
        %v1353 = vsel %vm738, %v1320, %v1322
        %v1354 = vsel %vm738, %v1322, %v1324
        %v1355 = vsel %vm738, %v1326, %v1328
        %v1356 = vsel %vm738, %v1328, %v1330
        %v1357 = vsel %vm738, %v1332, %v1334
        %v1358 = vsel %vm738, %v1334, %v1336
        %v1359 = vsel %vm738, %v1338, %v1340
        %v1360 = vsel %vm738, %v1340, %v1342
        %v1389 = vsel %vm784, %v1287, 0
        %1391 = vmatprep.subr.bf16.mxu0 %v1344
        %1392 = vmatpush1.bf16.msra.mxu0 %v1343
        %1393 = vmatprep.subr.bf16.mxu0 %v1346
        %1394 = vmatpush1.bf16.msra.mxu0 %v1345
        %1395 = vmatprep.subr.bf16.mxu0 %v1348
        %1396 = vmatpush1.bf16.msra.mxu0 %v1347
        %1397 = vmatprep.subr.bf16.mxu0 %v1350
        %1398 = vmatpush1.bf16.msra.mxu0 %v1349
        %1399 = vmatprep.subr.bf16.mxu0 %v1352
        %1400 = vmatpush1.bf16.msra.mxu0 %v1351
        %1401 = vmatprep.subr.bf16.mxu0 %v1354
        %1402 = vmatpush1.bf16.msra.mxu0 %v1353
        %1403 = vmatprep.subr.bf16.mxu0 %v1356
        %1404 = vmatpush1.bf16.msra.mxu0 %v1355
        %1405 = vmatprep.subr.bf16.mxu0 %v1358
        %1406 = vmatpush1.bf16.msra.mxu0 %v1357
        %1407 = vmatprep.subr.bf16.mxu0 %v1360
        %1408 = vmatpush1.bf16.msra.mxu0 %v1359
        %1409 = vmatprep.subr.bf16.mxu0 0
        %1410 = vmatpush1.bf16.msra.mxu0 0
        %1411 = vmatprep.subr.bf16.mxu0 0
        %1412 = vmatpush1.bf16.msra.mxu0 0
        %1413 = vmatprep.subr.bf16.mxu0 0
        %1414 = vmatpush1.bf16.msra.mxu0 0
        %1415 = vmatprep.subr.bf16.mxu0 0
        %1416 = vmatpush1.bf16.msra.mxu0 0
        %1417 = vmatprep.subr.bf16.mxu0 0
        %1418 = vmatpush1.bf16.msra.mxu0 0
        %1419 = vmatprep.subr.bf16.mxu0 0
        %1420 = vmatpush1.bf16.msra.mxu0 0
        %1421 = vmatprep.subr.bf16.mxu0 0
        %1422 = vmatpush1.bf16.msra.mxu0 0
        %1423 = vmatprep.mubr.bf16.mxu0 %v1389
        %1424 = vmatmul.mubr.bf16.gmra.mrb[0].mxu0 %v1286
        %v1425 = vpop.f32.mrb[0].mxu0
        %v1426 = vadd.f32 0.0, %v1425
        %v1427 = vpop.f32.mrb[0].mxu0
        %v1428 = vadd.f32 0.0, %v1427
        %v1429 = vpop.f32.mrb[0].mxu0
        %v1430 = vadd.f32 0.0, %v1429
        %v1431 = vpop.f32.mrb[0].mxu0
        %v1432 = vadd.f32 0.0, %v1431
        %1433 = vdwg.mxu0
        %1434 = vmatprep.subr.bf16.mxu0 0
        %1435 = vmatpush1.bf16.msra.mxu0 %v1294
        %1436 = vmatprep.subr.bf16.mxu0 0
        %1437 = vmatpush1.bf16.msra.mxu0 %v1300
        %1438 = vmatprep.subr.bf16.mxu0 0
        %1439 = vmatpush1.bf16.msra.mxu0 %v1306
        %1440 = vmatprep.subr.bf16.mxu0 0
        %1441 = vmatpush1.bf16.msra.mxu0 %v1312
        %1442 = vmatprep.subr.bf16.mxu0 0
        %1443 = vmatpush1.bf16.msra.mxu0 %v1318
        %1444 = vmatprep.subr.bf16.mxu0 0
        %1445 = vmatpush1.bf16.msra.mxu0 %v1324
        %1446 = vmatprep.subr.bf16.mxu0 0
        %1447 = vmatpush1.bf16.msra.mxu0 %v1330
        %1448 = vmatprep.subr.bf16.mxu0 0
        %1449 = vmatpush1.bf16.msra.mxu0 %v1336
        %1450 = vmatprep.subr.bf16.mxu0 0
        %1451 = vmatpush1.bf16.msra.mxu0 %v1342
        %1452 = vmatprep.subr.bf16.mxu0 0
        %1453 = vmatpush1.bf16.msra.mxu0 0
        %1454 = vmatprep.subr.bf16.mxu0 0
        %1455 = vmatpush1.bf16.msra.mxu0 0
        %1456 = vmatprep.subr.bf16.mxu0 0
        %1457 = vmatpush1.bf16.msra.mxu0 0
        %1458 = vmatprep.subr.bf16.mxu0 0
        %1459 = vmatpush1.bf16.msra.mxu0 0
        %1460 = vmatprep.subr.bf16.mxu0 0
        %1461 = vmatpush1.bf16.msra.mxu0 0
        %1462 = vmatprep.subr.bf16.mxu0 0
        %1463 = vmatpush1.bf16.msra.mxu0 0
        %1464 = vmatprep.subr.bf16.mxu0 0
        %1465 = vmatpush1.bf16.msra.mxu0 0
        %1466 = vmatprep.mubr.bf16.mxu0 %v1389
        %1467 = vmatmul.mubr.bf16.gmra.mrb[0].mxu0 %v1286
        %v1468 = vpop.f32.mrb[0].mxu0
        %v1469 = vadd.f32 0.0, %v1468
        %v1470 = vpop.f32.mrb[0].mxu0
        %v1471 = vpop.f32.mrb[0].mxu0
        %v1472 = vadd.f32 0.0, %v1471
        %v1473 = vpop.f32.mrb[0].mxu0
        %1474 = vdwg.mxu0
        %v1477 = vunpack.c.l.b16 %v997
        %v1478 = vunpack.c.h.b16 %v997
        %v1479 = vunpack.c.l.b16 %v999
        %v1480 = vunpack.c.h.b16 %v999
        %v1481 = vpack.c.b16 %v1479, %v1477
        %v1482 = vpack.c.b16 %v1480, %v1478
        %1485 = vmatprep.subr.bf16.mxu0 %v1047
        %1486 = vmatpush1.bf16.msra.mxu0 %v1046
        %1487 = vmatprep.subr.bf16.mxu0 %v1059
        %1488 = vmatpush1.bf16.msra.mxu0 %v1058
        %1489 = vmatprep.subr.bf16.mxu0 %v1070
        %1490 = vmatpush1.bf16.msra.mxu0 %v1069
        %1491 = vmatprep.subr.bf16.mxu0 %v1081
        %1492 = vmatpush1.bf16.msra.mxu0 %v1080
        %1493 = vmatprep.subr.bf16.mxu0 %v1092
        %1494 = vmatpush1.bf16.msra.mxu0 %v1091
        %1495 = vmatprep.subr.bf16.mxu0 %v1103
        %1496 = vmatpush1.bf16.msra.mxu0 %v1102
        %1497 = vmatprep.subr.bf16.mxu0 %v1114
        %1498 = vmatpush1.bf16.msra.mxu0 %v1113
        %1499 = vmatprep.subr.bf16.mxu0 %v1125
        %1500 = vmatpush1.bf16.msra.mxu0 %v1124
        %1501 = vmatprep.subr.bf16.mxu0 %v1136
        %1502 = vmatpush1.bf16.msra.mxu0 %v1135
        %1503 = vmatprep.subr.bf16.mxu0 %v1147
        %1504 = vmatpush1.bf16.msra.mxu0 %v1146
        %1505 = vmatprep.subr.bf16.mxu0 %v1158
        %1506 = vmatpush1.bf16.msra.mxu0 %v1157
        %1507 = vmatprep.subr.bf16.mxu0 %v1169
        %1508 = vmatpush1.bf16.msra.mxu0 %v1168
        %1509 = vmatprep.subr.bf16.mxu0 %v1180
        %1510 = vmatpush1.bf16.msra.mxu0 %v1179
        %1511 = vmatprep.subr.bf16.mxu0 %v1191
        %1512 = vmatpush1.bf16.msra.mxu0 %v1190
        %1513 = vmatprep.subr.bf16.mxu0 %v1202
        %1514 = vmatpush1.bf16.msra.mxu0 %v1201
        %1515 = vmatprep.subr.bf16.mxu0 %v1213
        %1516 = vmatpush1.bf16.msra.mxu0 %v1212
        %1517 = vmatprep.mubr.bf16.mxu0 %v1482
        %1518 = vmatmul.mubr.bf16.gmra.mrb[0].mxu0 %v1481
        %v1519 = vpop.f32.mrb[0].mxu0
        %v1520 = vadd.f32 %v1426, %v1519
        %v1521 = vpop.f32.mrb[0].mxu0
        %v1522 = vadd.f32 %v1428, %v1521
        %v1523 = vpop.f32.mrb[0].mxu0
        %v1524 = vadd.f32 %v1430, %v1523
        %v1525 = vpop.f32.mrb[0].mxu0
        %v1526 = vadd.f32 %v1432, %v1525
        %1527 = vdwg.mxu0
        %1528 = vmatprep.subr.bf16.mxu0 0
        %1529 = vmatpush1.bf16.msra.mxu0 %v1048
        %1530 = vmatprep.subr.bf16.mxu0 0
        %1531 = vmatpush1.bf16.msra.mxu0 %v1057
        %1532 = vmatprep.subr.bf16.mxu0 0
        %1533 = vmatpush1.bf16.msra.mxu0 %v1068
        %1534 = vmatprep.subr.bf16.mxu0 0
        %1535 = vmatpush1.bf16.msra.mxu0 %v1079
        %1536 = vmatprep.subr.bf16.mxu0 0
        %1537 = vmatpush1.bf16.msra.mxu0 %v1090
        %1538 = vmatprep.subr.bf16.mxu0 0
        %1539 = vmatpush1.bf16.msra.mxu0 %v1101
        %1540 = vmatprep.subr.bf16.mxu0 0
        %1541 = vmatpush1.bf16.msra.mxu0 %v1112
        %1542 = vmatprep.subr.bf16.mxu0 0
        %1543 = vmatpush1.bf16.msra.mxu0 %v1123
        %1544 = vmatprep.subr.bf16.mxu0 0
        %1545 = vmatpush1.bf16.msra.mxu0 %v1134
        %1546 = vmatprep.subr.bf16.mxu0 0
        %1547 = vmatpush1.bf16.msra.mxu0 %v1145
        %1548 = vmatprep.subr.bf16.mxu0 0
        %1549 = vmatpush1.bf16.msra.mxu0 %v1156
        %1550 = vmatprep.subr.bf16.mxu0 0
        %1551 = vmatpush1.bf16.msra.mxu0 %v1167
        %1552 = vmatprep.subr.bf16.mxu0 0
        %1553 = vmatpush1.bf16.msra.mxu0 %v1178
        %1554 = vmatprep.subr.bf16.mxu0 0
        %1555 = vmatpush1.bf16.msra.mxu0 %v1189
        %1556 = vmatprep.subr.bf16.mxu0 0
        %1557 = vmatpush1.bf16.msra.mxu0 %v1200
        %1558 = vmatprep.subr.bf16.mxu0 0
        %1559 = vmatpush1.bf16.msra.mxu0 %v1211
        %1560 = vmatprep.mubr.bf16.mxu0 %v1482
        %1561 = vmatmul.mubr.bf16.gmra.mrb[0].mxu0 %v1481
        %v1562 = vpop.f32.mrb[0].mxu0
        %v1563 = vadd.f32 %v1469, %v1562
        %v1564 = vpop.f32.mrb[0].mxu0
        %v1565 = vpop.f32.mrb[0].mxu0
        %v1566 = vadd.f32 %v1472, %v1565
        %v1567 = vpop.f32.mrb[0].mxu0
        %1568 = vdwg.mxu0
        %1570 = vset.pattern.permute.xlu0 0
        %1571 = vperm.xlu0 %1570, %v1003
        %v1572 = vpop.permute.xlu0 %1571
        %1575 = vset.pattern.permute.xlu0 0
        %1576 = vperm.xlu0 %1575, %v1004
        %v1577 = vpop.permute.xlu0 %1576
        %v1579 = vadd.f32 %v1520, %v1572
        %v1580 = vadd.f32 %v1522, %v1572
        %v1581 = vadd.f32 %v1563, %v1572
        %v1582 = vadd.f32 %v1524, %v1577
        %v1583 = vadd.f32 %v1526, %v1577
        %v1584 = vadd.f32 %v1566, %v1577
        %s1585 = smul.addr %s994, 4
        %s1586 = scalar_lea.vmem %s5, %s1585
        %v1587 = vld [vmem:[%s1586] sm:$0xff]
        %v1588 = vld [vmem:[%s1586 + $0x8] sm:$0xff]
        %v1589 = vld [vmem:[%s1586 + $0x10] sm:$0xff]
        %v1590 = vld [vmem:[%s1586 + $0x18] sm:$0xff]
        %s1591 = scalar_lea.vmem %s6, %s1001
        %v1592 = vld [vmem:[%s1591] sm:$0xff]
        %v1593 = vld [vmem:[%s1591 + $0x8] sm:$0xff]
        %v1594 = vmax.f32 %v1579, 0.0
        %v1595 = vmax.f32 %v1580, 0.0
        %v1596 = vmax.f32 %v1581, 0.0
        %v1597 = vmax.f32 %v1582, 0.0
        %v1598 = vmax.f32 %v1583, 0.0
        %v1599 = vmax.f32 %v1584, 0.0
        %v1600 = vsel %vm1014, %v1594, 0.0
        %v1601 = vsel %vm1015, %v1595, 0.0
        %v1602 = vsel %vm1016, %v1596, 0.0
        %v1603 = vsel %vm1014, %v1597, 0.0
        %v1604 = vsel %vm1015, %v1598, 0.0
        %v1605 = vsel %vm1016, %v1599, 0.0
        %v1606 = vpack.c.bf16 %v1603, %v1600
        %v1607 = vpack.c.bf16 %v1604, %v1601
        %v1608 = vpack.c.bf16 %v1605, %v1602
        %1612 = vrot.lane.b32.xlu0 %v1606, 42
        %v1613 = vpop.permute.xlu0 %1612
        %1614 = vrot.lane.b32.xlu0 %v1607, 42
        %v1615 = vpop.permute.xlu0 %1614
        %1616 = vrot.lane.b32.xlu0 %v1608, 42
        %v1617 = vpop.permute.xlu0 %1616
        %v1618 = vsel %vm1035, %v1613, %v1615
        %v1619 = vsel %vm1035, %v1615, %v1617
        %1623 = vst.msk [vmem:[#allocation2] sm:$0xff] %vm1041, %v1613
        %1624 = vst [vmem:[#allocation2 + $0x8] sm:$0xff] %v1618
        %1625 = vst.msk [vmem:[#allocation2 + $0x10] sm:$0xff] %vm1044, %v1619
        %v1626 = vld [vmem:[#allocation2] sm:$0xff]
        %v1627 = vld [vmem:[#allocation2 + $0x8] sm:$0xff]
        %v1628 = vld [vmem:[#allocation2 + $0x10] sm:$0xff]
        %1632 = vrot.lane.b32.xlu0 %v1626, 127
        %v1633 = vpop.permute.xlu0 %1632
        %1634 = vrot.lane.b32.xlu0 %v1627, 127
        %v1635 = vpop.permute.xlu0 %1634
        %1636 = vrot.lane.b32.xlu0 %v1628, 127
        %v1637 = vpop.permute.xlu0 %1636
        %v1638 = vsel %vm425, %v1633, %v1635
        %v1639 = vsel %vm425, %v1635, %v1637
        %1643 = vrot.lane.b32.xlu0 %v1626, 126
        %v1644 = vpop.permute.xlu0 %1643
        %1645 = vrot.lane.b32.xlu0 %v1627, 126
        %v1646 = vpop.permute.xlu0 %1645
        %1647 = vrot.lane.b32.xlu0 %v1628, 126
        %v1648 = vpop.permute.xlu0 %1647
        %v1649 = vsel %vm437, %v1644, %v1646
        %v1650 = vsel %vm437, %v1646, %v1648
        %1654 = vrot.lane.b32.xlu0 %v1626, 125
        %v1655 = vpop.permute.xlu0 %1654
        %1656 = vrot.lane.b32.xlu0 %v1627, 125
        %v1657 = vpop.permute.xlu0 %1656
        %1658 = vrot.lane.b32.xlu0 %v1628, 125
        %v1659 = vpop.permute.xlu0 %1658
        %v1660 = vsel %vm449, %v1655, %v1657
        %v1661 = vsel %vm449, %v1657, %v1659
        %1665 = vrot.lane.b32.xlu0 %v1626, 124
        %v1666 = vpop.permute.xlu0 %1665
        %1667 = vrot.lane.b32.xlu0 %v1627, 124
        %v1668 = vpop.permute.xlu0 %1667
        %1669 = vrot.lane.b32.xlu0 %v1628, 124
        %v1670 = vpop.permute.xlu0 %1669
        %v1671 = vsel %vm461, %v1666, %v1668
        %v1672 = vsel %vm461, %v1668, %v1670
        %1676 = vrot.lane.b32.xlu0 %v1626, 108
        %v1677 = vpop.permute.xlu0 %1676
        %1678 = vrot.lane.b32.xlu0 %v1627, 108
        %v1679 = vpop.permute.xlu0 %1678
        %1680 = vrot.lane.b32.xlu0 %v1628, 108
        %v1681 = vpop.permute.xlu0 %1680
        %v1682 = vsel %vm473, %v1677, %v1679
        %v1683 = vsel %vm473, %v1679, %v1681
        %1687 = vrot.lane.b32.xlu0 %v1626, 107
        %v1688 = vpop.permute.xlu0 %1687
        %1689 = vrot.lane.b32.xlu0 %v1627, 107
        %v1690 = vpop.permute.xlu0 %1689
        %1691 = vrot.lane.b32.xlu0 %v1628, 107
        %v1692 = vpop.permute.xlu0 %1691
        %v1693 = vsel %vm485, %v1688, %v1690
        %v1694 = vsel %vm485, %v1690, %v1692
        %1698 = vrot.lane.b32.xlu0 %v1626, 106
        %v1699 = vpop.permute.xlu0 %1698
        %1700 = vrot.lane.b32.xlu0 %v1627, 106
        %v1701 = vpop.permute.xlu0 %1700
        %1702 = vrot.lane.b32.xlu0 %v1628, 106
        %v1703 = vpop.permute.xlu0 %1702
        %v1704 = vsel %vm497, %v1699, %v1701
        %v1705 = vsel %vm497, %v1701, %v1703
        %1709 = vrot.lane.b32.xlu0 %v1626, 105
        %v1710 = vpop.permute.xlu0 %1709
        %1711 = vrot.lane.b32.xlu0 %v1627, 105
        %v1712 = vpop.permute.xlu0 %1711
        %1713 = vrot.lane.b32.xlu0 %v1628, 105
        %v1714 = vpop.permute.xlu0 %1713
        %v1715 = vsel %vm509, %v1710, %v1712
        %v1716 = vsel %vm509, %v1712, %v1714
        %1720 = vrot.lane.b32.xlu0 %v1626, 104
        %v1721 = vpop.permute.xlu0 %1720
        %1722 = vrot.lane.b32.xlu0 %v1627, 104
        %v1723 = vpop.permute.xlu0 %1722
        %1724 = vrot.lane.b32.xlu0 %v1628, 104
        %v1725 = vpop.permute.xlu0 %1724
        %v1726 = vsel %vm521, %v1721, %v1723
        %v1727 = vsel %vm521, %v1723, %v1725
        %1731 = vrot.lane.b32.xlu0 %v1626, 88
        %v1732 = vpop.permute.xlu0 %1731
        %1733 = vrot.lane.b32.xlu0 %v1627, 88
        %v1734 = vpop.permute.xlu0 %1733
        %1735 = vrot.lane.b32.xlu0 %v1628, 88
        %v1736 = vpop.permute.xlu0 %1735
        %v1737 = vsel %vm533, %v1732, %v1734
        %v1738 = vsel %vm533, %v1734, %v1736
        %1742 = vrot.lane.b32.xlu0 %v1626, 87
        %v1743 = vpop.permute.xlu0 %1742
        %1744 = vrot.lane.b32.xlu0 %v1627, 87
        %v1745 = vpop.permute.xlu0 %1744
        %1746 = vrot.lane.b32.xlu0 %v1628, 87
        %v1747 = vpop.permute.xlu0 %1746
        %v1748 = vsel %vm545, %v1743, %v1745
        %v1749 = vsel %vm545, %v1745, %v1747
        %1753 = vrot.lane.b32.xlu0 %v1626, 86
        %v1754 = vpop.permute.xlu0 %1753
        %1755 = vrot.lane.b32.xlu0 %v1627, 86
        %v1756 = vpop.permute.xlu0 %1755
        %1757 = vrot.lane.b32.xlu0 %v1628, 86
        %v1758 = vpop.permute.xlu0 %1757
        %v1759 = vsel %vm557, %v1754, %v1756
        %v1760 = vsel %vm557, %v1756, %v1758
        %1764 = vrot.lane.b32.xlu0 %v1626, 85
        %v1765 = vpop.permute.xlu0 %1764
        %1766 = vrot.lane.b32.xlu0 %v1627, 85
        %v1767 = vpop.permute.xlu0 %1766
        %1768 = vrot.lane.b32.xlu0 %v1628, 85
        %v1769 = vpop.permute.xlu0 %1768
        %v1770 = vsel %vm569, %v1765, %v1767
        %v1771 = vsel %vm569, %v1767, %v1769
        %1775 = vrot.lane.b32.xlu0 %v1626, 84
        %v1776 = vpop.permute.xlu0 %1775
        %1777 = vrot.lane.b32.xlu0 %v1627, 84
        %v1778 = vpop.permute.xlu0 %1777
        %1779 = vrot.lane.b32.xlu0 %v1628, 84
        %v1780 = vpop.permute.xlu0 %1779
        %v1781 = vsel %vm581, %v1776, %v1778
        %v1782 = vsel %vm581, %v1778, %v1780
        %1786 = vrot.lane.b32.xlu0 %v1626, 68
        %v1787 = vpop.permute.xlu0 %1786
        %1788 = vrot.lane.b32.xlu0 %v1627, 68
        %v1789 = vpop.permute.xlu0 %1788
        %1790 = vrot.lane.b32.xlu0 %v1628, 68
        %v1791 = vpop.permute.xlu0 %1790
        %v1792 = vsel %vm593, %v1787, %v1789
        %v1793 = vsel %vm593, %v1789, %v1791
        %v1797 = vld [vmem:[#allocation2] sm:$0xff]
        %v1798 = vld [vmem:[#allocation2 + $0x8] sm:$0xff]
        %v1799 = vld [vmem:[#allocation2 + $0x10] sm:$0xff]
        %v1800 = vld [vmem:[#allocation2 + $0x18] sm:$0xff]
        %1805 = vrot.lane.b32.xlu0 %v1797, 109
        %v1806 = vpop.permute.xlu0 %1805
        %1807 = vrot.lane.b32.xlu0 %v1798, 109
        %v1808 = vpop.permute.xlu0 %1807
        %1809 = vrot.lane.b32.xlu0 %v1799, 109
        %v1810 = vpop.permute.xlu0 %1809
        %1811 = vrot.lane.b32.xlu0 %v1800, 109
        %v1812 = vpop.permute.xlu0 %1811
        %v1813 = vsel %vm627, %v1806, %v1808
        %v1814 = vsel %vm627, %v1808, %v1810
        %v1815 = vsel %vm627, %v1810, %v1812
        %1816 = vrot.lane.b32.xlu0 %v1797, 108
        %v1817 = vpop.permute.xlu0 %1816
        %1818 = vrot.lane.b32.xlu0 %v1798, 108
        %v1819 = vpop.permute.xlu0 %1818
        %1820 = vrot.lane.b32.xlu0 %v1799, 108
        %v1821 = vpop.permute.xlu0 %1820
        %1822 = vrot.lane.b32.xlu0 %v1800, 108
        %v1823 = vpop.permute.xlu0 %1822
        %v1824 = vsel %vm473, %v1817, %v1819
        %v1825 = vsel %vm473, %v1819, %v1821
        %v1826 = vsel %vm473, %v1821, %v1823
        %1827 = vrot.lane.b32.xlu0 %v1797, 107
        %v1828 = vpop.permute.xlu0 %1827
        %1829 = vrot.lane.b32.xlu0 %v1798, 107
        %v1830 = vpop.permute.xlu0 %1829
        %1831 = vrot.lane.b32.xlu0 %v1799, 107
        %v1832 = vpop.permute.xlu0 %1831
        %1833 = vrot.lane.b32.xlu0 %v1800, 107
        %v1834 = vpop.permute.xlu0 %1833
        %v1835 = vsel %vm485, %v1828, %v1830
        %v1836 = vsel %vm485, %v1830, %v1832
        %v1837 = vsel %vm485, %v1832, %v1834
        %1838 = vrot.lane.b32.xlu0 %v1797, 106
        %v1839 = vpop.permute.xlu0 %1838
        %1840 = vrot.lane.b32.xlu0 %v1798, 106
        %v1841 = vpop.permute.xlu0 %1840
        %1842 = vrot.lane.b32.xlu0 %v1799, 106
        %v1843 = vpop.permute.xlu0 %1842
        %1844 = vrot.lane.b32.xlu0 %v1800, 106
        %v1845 = vpop.permute.xlu0 %1844
        %v1846 = vsel %vm497, %v1839, %v1841
        %v1847 = vsel %vm497, %v1841, %v1843
        %v1848 = vsel %vm497, %v1843, %v1845
        %1849 = vrot.lane.b32.xlu0 %v1797, 105
        %v1850 = vpop.permute.xlu0 %1849
        %1851 = vrot.lane.b32.xlu0 %v1798, 105
        %v1852 = vpop.permute.xlu0 %1851
        %1853 = vrot.lane.b32.xlu0 %v1799, 105
        %v1854 = vpop.permute.xlu0 %1853
        %1855 = vrot.lane.b32.xlu0 %v1800, 105
        %v1856 = vpop.permute.xlu0 %1855
        %v1857 = vsel %vm509, %v1850, %v1852
        %v1858 = vsel %vm509, %v1852, %v1854
        %v1859 = vsel %vm509, %v1854, %v1856
        %v1862 = vunpack.c.l.b16 %v1588
        %v1863 = vunpack.c.h.b16 %v1588
        %v1864 = vunpack.c.l.b16 %v1590
        %v1865 = vunpack.c.h.b16 %v1590
        %v1866 = vpack.c.b16 %v1864, %v1862
        %v1867 = vpack.c.b16 %v1865, %v1863
        %1869 = vrot.lane.b32.xlu0 %v1626, 67
        %v1870 = vpop.permute.xlu0 %1869
        %1871 = vrot.lane.b32.xlu0 %v1627, 67
        %v1872 = vpop.permute.xlu0 %1871
        %1873 = vrot.lane.b32.xlu0 %v1628, 67
        %v1874 = vpop.permute.xlu0 %1873
        %1875 = vrot.lane.b32.xlu0 %v1638, 67
        %v1876 = vpop.permute.xlu0 %1875
        %1877 = vrot.lane.b32.xlu0 %v1639, 67
        %v1878 = vpop.permute.xlu0 %1877
        %1879 = vrot.lane.b32.xlu0 %v1637, 67
        %v1880 = vpop.permute.xlu0 %1879
        %1881 = vrot.lane.b32.xlu0 %v1649, 67
        %v1882 = vpop.permute.xlu0 %1881
        %1883 = vrot.lane.b32.xlu0 %v1650, 67
        %v1884 = vpop.permute.xlu0 %1883
        %1885 = vrot.lane.b32.xlu0 %v1648, 67
        %v1886 = vpop.permute.xlu0 %1885
        %1887 = vrot.lane.b32.xlu0 %v1660, 67
        %v1888 = vpop.permute.xlu0 %1887
        %1889 = vrot.lane.b32.xlu0 %v1661, 67
        %v1890 = vpop.permute.xlu0 %1889
        %1891 = vrot.lane.b32.xlu0 %v1659, 67
        %v1892 = vpop.permute.xlu0 %1891
        %1893 = vrot.lane.b32.xlu0 %v1813, 67
        %v1894 = vpop.permute.xlu0 %1893
        %1895 = vrot.lane.b32.xlu0 %v1814, 67
        %v1896 = vpop.permute.xlu0 %1895
        %1897 = vrot.lane.b32.xlu0 %v1815, 67
        %v1898 = vpop.permute.xlu0 %1897
        %1899 = vrot.lane.b32.xlu0 %v1824, 67
        %v1900 = vpop.permute.xlu0 %1899
        %1901 = vrot.lane.b32.xlu0 %v1825, 67
        %v1902 = vpop.permute.xlu0 %1901
        %1903 = vrot.lane.b32.xlu0 %v1826, 67
        %v1904 = vpop.permute.xlu0 %1903
        %1905 = vrot.lane.b32.xlu0 %v1835, 67
        %v1906 = vpop.permute.xlu0 %1905
        %1907 = vrot.lane.b32.xlu0 %v1836, 67
        %v1908 = vpop.permute.xlu0 %1907
        %1909 = vrot.lane.b32.xlu0 %v1837, 67
        %v1910 = vpop.permute.xlu0 %1909
        %1911 = vrot.lane.b32.xlu0 %v1846, 67
        %v1912 = vpop.permute.xlu0 %1911
        %1913 = vrot.lane.b32.xlu0 %v1847, 67
        %v1914 = vpop.permute.xlu0 %1913
        %1915 = vrot.lane.b32.xlu0 %v1848, 67
        %v1916 = vpop.permute.xlu0 %1915
        %1917 = vrot.lane.b32.xlu0 %v1857, 67
        %v1918 = vpop.permute.xlu0 %1917
        %1919 = vrot.lane.b32.xlu0 %v1858, 67
        %v1920 = vpop.permute.xlu0 %1919
        %1921 = vrot.lane.b32.xlu0 %v1859, 67
        %v1922 = vpop.permute.xlu0 %1921
        %v1923 = vsel %vm738, %v1870, %v1872
        %v1924 = vsel %vm738, %v1872, %v1874
        %v1925 = vsel %vm738, %v1876, %v1878
        %v1926 = vsel %vm738, %v1878, %v1880
        %v1927 = vsel %vm738, %v1882, %v1884
        %v1928 = vsel %vm738, %v1884, %v1886
        %v1929 = vsel %vm738, %v1888, %v1890
        %v1930 = vsel %vm738, %v1890, %v1892
        %v1931 = vsel %vm738, %v1894, %v1896
        %v1932 = vsel %vm738, %v1896, %v1898
        %v1933 = vsel %vm738, %v1900, %v1902
        %v1934 = vsel %vm738, %v1902, %v1904
        %v1935 = vsel %vm738, %v1906, %v1908
        %v1936 = vsel %vm738, %v1908, %v1910
        %v1937 = vsel %vm738, %v1912, %v1914
        %v1938 = vsel %vm738, %v1914, %v1916
        %v1939 = vsel %vm738, %v1918, %v1920
        %v1940 = vsel %vm738, %v1920, %v1922
        %v1969 = vsel %vm784, %v1867, 0
        %1971 = vmatprep.subr.bf16.mxu0 %v1924
        %1972 = vmatpush1.bf16.msra.mxu0 %v1923
        %1973 = vmatprep.subr.bf16.mxu0 %v1926
        %1974 = vmatpush1.bf16.msra.mxu0 %v1925
        %1975 = vmatprep.subr.bf16.mxu0 %v1928
        %1976 = vmatpush1.bf16.msra.mxu0 %v1927
        %1977 = vmatprep.subr.bf16.mxu0 %v1930
        %1978 = vmatpush1.bf16.msra.mxu0 %v1929
        %1979 = vmatprep.subr.bf16.mxu0 %v1932
        %1980 = vmatpush1.bf16.msra.mxu0 %v1931
        %1981 = vmatprep.subr.bf16.mxu0 %v1934
        %1982 = vmatpush1.bf16.msra.mxu0 %v1933
        %1983 = vmatprep.subr.bf16.mxu0 %v1936
        %1984 = vmatpush1.bf16.msra.mxu0 %v1935
        %1985 = vmatprep.subr.bf16.mxu0 %v1938
        %1986 = vmatpush1.bf16.msra.mxu0 %v1937
        %1987 = vmatprep.subr.bf16.mxu0 %v1940
        %1988 = vmatpush1.bf16.msra.mxu0 %v1939
        %1989 = vmatprep.subr.bf16.mxu0 0
        %1990 = vmatpush1.bf16.msra.mxu0 0
        %1991 = vmatprep.subr.bf16.mxu0 0
        %1992 = vmatpush1.bf16.msra.mxu0 0
        %1993 = vmatprep.subr.bf16.mxu0 0
        %1994 = vmatpush1.bf16.msra.mxu0 0
        %1995 = vmatprep.subr.bf16.mxu0 0
        %1996 = vmatpush1.bf16.msra.mxu0 0
        %1997 = vmatprep.subr.bf16.mxu0 0
        %1998 = vmatpush1.bf16.msra.mxu0 0
        %1999 = vmatprep.subr.bf16.mxu0 0
        %2000 = vmatpush1.bf16.msra.mxu0 0
        %2001 = vmatprep.subr.bf16.mxu0 0
        %2002 = vmatpush1.bf16.msra.mxu0 0
        %2003 = vmatprep.mubr.bf16.mxu0 %v1969
        %2004 = vmatmul.mubr.bf16.gmra.mrb[0].mxu0 %v1866
        %v2005 = vpop.f32.mrb[0].mxu0
        %v2006 = vadd.f32 0.0, %v2005
        %v2007 = vpop.f32.mrb[0].mxu0
        %v2008 = vadd.f32 0.0, %v2007
        %v2009 = vpop.f32.mrb[0].mxu0
        %v2010 = vadd.f32 0.0, %v2009
        %v2011 = vpop.f32.mrb[0].mxu0
        %v2012 = vadd.f32 0.0, %v2011
        %2013 = vdwg.mxu0
        %2014 = vmatprep.subr.bf16.mxu0 0
        %2015 = vmatpush1.bf16.msra.mxu0 %v1874
        %2016 = vmatprep.subr.bf16.mxu0 0
        %2017 = vmatpush1.bf16.msra.mxu0 %v1880
        %2018 = vmatprep.subr.bf16.mxu0 0
        %2019 = vmatpush1.bf16.msra.mxu0 %v1886
        %2020 = vmatprep.subr.bf16.mxu0 0
        %2021 = vmatpush1.bf16.msra.mxu0 %v1892
        %2022 = vmatprep.subr.bf16.mxu0 0
        %2023 = vmatpush1.bf16.msra.mxu0 %v1898
        %2024 = vmatprep.subr.bf16.mxu0 0
        %2025 = vmatpush1.bf16.msra.mxu0 %v1904
        %2026 = vmatprep.subr.bf16.mxu0 0
        %2027 = vmatpush1.bf16.msra.mxu0 %v1910
        %2028 = vmatprep.subr.bf16.mxu0 0
        %2029 = vmatpush1.bf16.msra.mxu0 %v1916
        %2030 = vmatprep.subr.bf16.mxu0 0
        %2031 = vmatpush1.bf16.msra.mxu0 %v1922
        %2032 = vmatprep.subr.bf16.mxu0 0
        %2033 = vmatpush1.bf16.msra.mxu0 0
        %2034 = vmatprep.subr.bf16.mxu0 0
        %2035 = vmatpush1.bf16.msra.mxu0 0
        %2036 = vmatprep.subr.bf16.mxu0 0
        %2037 = vmatpush1.bf16.msra.mxu0 0
        %2038 = vmatprep.subr.bf16.mxu0 0
        %2039 = vmatpush1.bf16.msra.mxu0 0
        %2040 = vmatprep.subr.bf16.mxu0 0
        %2041 = vmatpush1.bf16.msra.mxu0 0
        %2042 = vmatprep.subr.bf16.mxu0 0
        %2043 = vmatpush1.bf16.msra.mxu0 0
        %2044 = vmatprep.subr.bf16.mxu0 0
        %2045 = vmatpush1.bf16.msra.mxu0 0
        %2046 = vmatprep.mubr.bf16.mxu0 %v1969
        %2047 = vmatmul.mubr.bf16.gmra.mrb[0].mxu0 %v1866
        %v2048 = vpop.f32.mrb[0].mxu0
        %v2049 = vadd.f32 0.0, %v2048
        %v2050 = vpop.f32.mrb[0].mxu0
        %v2051 = vpop.f32.mrb[0].mxu0
        %v2052 = vadd.f32 0.0, %v2051
        %v2053 = vpop.f32.mrb[0].mxu0
        %2054 = vdwg.mxu0
        %v2057 = vunpack.c.l.b16 %v1587
        %v2058 = vunpack.c.h.b16 %v1587
        %v2059 = vunpack.c.l.b16 %v1589
        %v2060 = vunpack.c.h.b16 %v1589
        %v2061 = vpack.c.b16 %v2059, %v2057
        %v2062 = vpack.c.b16 %v2060, %v2058
        %2065 = vmatprep.subr.bf16.mxu0 %v1627
        %2066 = vmatpush1.bf16.msra.mxu0 %v1626
        %2067 = vmatprep.subr.bf16.mxu0 %v1639
        %2068 = vmatpush1.bf16.msra.mxu0 %v1638
        %2069 = vmatprep.subr.bf16.mxu0 %v1650
        %2070 = vmatpush1.bf16.msra.mxu0 %v1649
        %2071 = vmatprep.subr.bf16.mxu0 %v1661
        %2072 = vmatpush1.bf16.msra.mxu0 %v1660
        %2073 = vmatprep.subr.bf16.mxu0 %v1672
        %2074 = vmatpush1.bf16.msra.mxu0 %v1671
        %2075 = vmatprep.subr.bf16.mxu0 %v1683
        %2076 = vmatpush1.bf16.msra.mxu0 %v1682
        %2077 = vmatprep.subr.bf16.mxu0 %v1694
        %2078 = vmatpush1.bf16.msra.mxu0 %v1693
        %2079 = vmatprep.subr.bf16.mxu0 %v1705
        %2080 = vmatpush1.bf16.msra.mxu0 %v1704
        %2081 = vmatprep.subr.bf16.mxu0 %v1716
        %2082 = vmatpush1.bf16.msra.mxu0 %v1715
        %2083 = vmatprep.subr.bf16.mxu0 %v1727
        %2084 = vmatpush1.bf16.msra.mxu0 %v1726
        %2085 = vmatprep.subr.bf16.mxu0 %v1738
        %2086 = vmatpush1.bf16.msra.mxu0 %v1737
        %2087 = vmatprep.subr.bf16.mxu0 %v1749
        %2088 = vmatpush1.bf16.msra.mxu0 %v1748
        %2089 = vmatprep.subr.bf16.mxu0 %v1760
        %2090 = vmatpush1.bf16.msra.mxu0 %v1759
        %2091 = vmatprep.subr.bf16.mxu0 %v1771
        %2092 = vmatpush1.bf16.msra.mxu0 %v1770
        %2093 = vmatprep.subr.bf16.mxu0 %v1782
        %2094 = vmatpush1.bf16.msra.mxu0 %v1781
        %2095 = vmatprep.subr.bf16.mxu0 %v1793
        %2096 = vmatpush1.bf16.msra.mxu0 %v1792
        %2097 = vmatprep.mubr.bf16.mxu0 %v2062
        %2098 = vmatmul.mubr.bf16.gmra.mrb[0].mxu0 %v2061
        %v2099 = vpop.f32.mrb[0].mxu0
        %v2100 = vadd.f32 %v2006, %v2099
        %v2101 = vpop.f32.mrb[0].mxu0
        %v2102 = vadd.f32 %v2008, %v2101
        %v2103 = vpop.f32.mrb[0].mxu0
        %v2104 = vadd.f32 %v2010, %v2103
        %v2105 = vpop.f32.mrb[0].mxu0
        %v2106 = vadd.f32 %v2012, %v2105
        %2107 = vdwg.mxu0
        %2108 = vmatprep.subr.bf16.mxu0 0
        %2109 = vmatpush1.bf16.msra.mxu0 %v1628
        %2110 = vmatprep.subr.bf16.mxu0 0
        %2111 = vmatpush1.bf16.msra.mxu0 %v1637
        %2112 = vmatprep.subr.bf16.mxu0 0
        %2113 = vmatpush1.bf16.msra.mxu0 %v1648
        %2114 = vmatprep.subr.bf16.mxu0 0
        %2115 = vmatpush1.bf16.msra.mxu0 %v1659
        %2116 = vmatprep.subr.bf16.mxu0 0
        %2117 = vmatpush1.bf16.msra.mxu0 %v1670
        %2118 = vmatprep.subr.bf16.mxu0 0
        %2119 = vmatpush1.bf16.msra.mxu0 %v1681
        %2120 = vmatprep.subr.bf16.mxu0 0
        %2121 = vmatpush1.bf16.msra.mxu0 %v1692
        %2122 = vmatprep.subr.bf16.mxu0 0
        %2123 = vmatpush1.bf16.msra.mxu0 %v1703
        %2124 = vmatprep.subr.bf16.mxu0 0
        %2125 = vmatpush1.bf16.msra.mxu0 %v1714
        %2126 = vmatprep.subr.bf16.mxu0 0
        %2127 = vmatpush1.bf16.msra.mxu0 %v1725
        %2128 = vmatprep.subr.bf16.mxu0 0
        %2129 = vmatpush1.bf16.msra.mxu0 %v1736
        %2130 = vmatprep.subr.bf16.mxu0 0
        %2131 = vmatpush1.bf16.msra.mxu0 %v1747
        %2132 = vmatprep.subr.bf16.mxu0 0
        %2133 = vmatpush1.bf16.msra.mxu0 %v1758
        %2134 = vmatprep.subr.bf16.mxu0 0
        %2135 = vmatpush1.bf16.msra.mxu0 %v1769
        %2136 = vmatprep.subr.bf16.mxu0 0
        %2137 = vmatpush1.bf16.msra.mxu0 %v1780
        %2138 = vmatprep.subr.bf16.mxu0 0
        %2139 = vmatpush1.bf16.msra.mxu0 %v1791
        %2140 = vmatprep.mubr.bf16.mxu0 %v2062
        %2141 = vmatmul.mubr.bf16.gmra.mrb[0].mxu0 %v2061
        %v2142 = vpop.f32.mrb[0].mxu0
        %v2143 = vadd.f32 %v2049, %v2142
        %v2144 = vpop.f32.mrb[0].mxu0
        %v2145 = vpop.f32.mrb[0].mxu0
        %v2146 = vadd.f32 %v2052, %v2145
        %v2147 = vpop.f32.mrb[0].mxu0
        %2148 = vdwg.mxu0
        %2150 = vset.pattern.permute.xlu0 0
        %2151 = vperm.xlu0 %2150, %v1592
        %v2152 = vpop.permute.xlu0 %2151
        %2155 = vset.pattern.permute.xlu0 0
        %2156 = vperm.xlu0 %2155, %v1593
        %v2157 = vpop.permute.xlu0 %2156
        %v2159 = vadd.f32 %v2100, %v2152
        %v2160 = vadd.f32 %v2102, %v2152
        %v2161 = vadd.f32 %v2143, %v2152
        %v2162 = vadd.f32 %v2104, %v2157
        %v2163 = vadd.f32 %v2106, %v2157
        %v2164 = vadd.f32 %v2146, %v2157
        %v2165 = vadd.f32 %v988, %v2159
        %v2166 = vadd.f32 %v989, %v2160
        %v2167 = vadd.f32 %v990, %v2161
        %v2168 = vadd.f32 %v991, %v2162
        %v2169 = vadd.f32 %v992, %v2163
        %v2170 = vadd.f32 %v993, %v2164
      $region61: #{resnet_con_forward.1} parent=55 // loop_footer
        %s987 = sadd.s32 1, %s983
      $region62: #{resnet_con_forward.1} parent=55 // loop_footer_branch
        %982 = sbr.rel target = $region58
      $region63: #{resnet_con_forward.1} parent=55 // loop_exit
        _
      %v2171 = vld [vmem:[%s7] sm:$0xf]
      %v2172 = vld [vmem:[%s7 + $0x4] sm:$0xf]
      %v2173 = vld [vmem:[%s7 + $0x8] sm:$0xf]
      %v2174 = vpack.c.bf16 %v991, %v988
      %v2175 = vpack.c.bf16 %v992, %v989
      %v2176 = vpack.c.bf16 %v993, %v990
      %v2177 = vld [vmem:[%s8] sm:$0xff]
      %v2178 = vld [vmem:[%s8 + $0x8] sm:$0xff]
      %v2179 = vld [vmem:[%s8 + $0x10] sm:$0xff]
      %2181 = vset.pattern.permute.xlu0 0
      %2182 = vperm.xlu0 %2181, %v2177
      %v2183 = vpop.permute.xlu0 %2182
      %2186 = vset.pattern.permute.xlu0 0
      %2187 = vperm.xlu0 %2186, %v2178
      %v2188 = vpop.permute.xlu0 %2187
      %2191 = vset.pattern.permute.xlu0 0
      %2192 = vperm.xlu0 %2191, %v2179
      %v2193 = vpop.permute.xlu0 %2192
      %v2198 = vunpack.c.l.b16 %v2171
      %v2199 = vunpack.c.l.b16 %v2172
      %v2200 = vunpack.c.l.b16 %v2173
      %v2201 = vpack.c.b16 %v2199, %v2198
      %v2202 = vpack.c.b16 %v2200, %v2200
      %v2204 = vsel %vm784, %v2201, 0
      %v2207 = vsel %vm784, %v2202, 0
      %2209 = vmatprep.subr.bf16.mxu0 %v2175
      %2210 = vmatpush1.bf16.msra.mxu0 %v2174
      %2211 = vmatprep.subr.bf16.mxu0 0
      %2212 = vmatpush1.bf16.msra.mxu0 0
      %2213 = vmatprep.subr.bf16.mxu0 0
      %2214 = vmatpush1.bf16.msra.mxu0 0
      %2215 = vmatprep.subr.bf16.mxu0 0
      %2216 = vmatpush1.bf16.msra.mxu0 0
      %2217 = vmatprep.subr.bf16.mxu0 0
      %2218 = vmatpush1.bf16.msra.mxu0 0
      %2219 = vmatprep.subr.bf16.mxu0 0
      %2220 = vmatpush1.bf16.msra.mxu0 0
      %2221 = vmatprep.subr.bf16.mxu0 0
      %2222 = vmatpush1.bf16.msra.mxu0 0
      %2223 = vmatprep.subr.bf16.mxu0 0
      %2224 = vmatpush1.bf16.msra.mxu0 0
      %2225 = vmatprep.subr.bf16.mxu0 0
      %2226 = vmatpush1.bf16.msra.mxu0 0
      %2227 = vmatprep.subr.bf16.mxu0 0
      %2228 = vmatpush1.bf16.msra.mxu0 0
      %2229 = vmatprep.subr.bf16.mxu0 0
      %2230 = vmatpush1.bf16.msra.mxu0 0
      %2231 = vmatprep.subr.bf16.mxu0 0
      %2232 = vmatpush1.bf16.msra.mxu0 0
      %2233 = vmatprep.subr.bf16.mxu0 0
      %2234 = vmatpush1.bf16.msra.mxu0 0
      %2235 = vmatprep.subr.bf16.mxu0 0
      %2236 = vmatpush1.bf16.msra.mxu0 0
      %2237 = vmatprep.subr.bf16.mxu0 0
      %2238 = vmatpush1.bf16.msra.mxu0 0
      %2239 = vmatprep.subr.bf16.mxu0 0
      %2240 = vmatpush1.bf16.msra.mxu0 0
      %2241 = vmatprep.mubr.bf16.mxu0 0
      %2242 = vmatmul.mubr.bf16.gmra.mrb[0].mxu0 %v2204
      %v2243 = vpop.f32.mrb[0].mxu0
      %v2244 = vadd.f32 %v2183, %v2243
      %v2245 = vpop.f32.mrb[0].mxu0
      %v2246 = vadd.f32 %v2183, %v2245
      %v2247 = vpop.f32.mrb[0].mxu0
      %v2248 = vadd.f32 %v2188, %v2247
      %v2249 = vpop.f32.mrb[0].mxu0
      %v2250 = vadd.f32 %v2188, %v2249
      %2251 = vmatprep.mubr.bf16.mxu0 0
      %2252 = vmatmul.mubr.bf16.gmra.mrb[0].mxu0 %v2207
      %v2253 = vpop.f32.mrb[0].mxu0
      %v2254 = vadd.f32 %v2193, %v2253
      %v2255 = vpop.f32.mrb[0].mxu0
      %v2256 = vadd.f32 %v2193, %v2255
      %v2257 = vpop.f32.mrb[0].mxu0
      %v2258 = vpop.f32.mrb[0].mxu0
      %2259 = vdwg.mxu0
      %2260 = vmatprep.subr.bf16.mxu0 0
      %2261 = vmatpush1.bf16.msra.mxu0 %v2176
      %2262 = vmatprep.subr.bf16.mxu0 0
      %2263 = vmatpush1.bf16.msra.mxu0 0
      %2264 = vmatprep.subr.bf16.mxu0 0
      %2265 = vmatpush1.bf16.msra.mxu0 0
      %2266 = vmatprep.subr.bf16.mxu0 0
      %2267 = vmatpush1.bf16.msra.mxu0 0
      %2268 = vmatprep.subr.bf16.mxu0 0
      %2269 = vmatpush1.bf16.msra.mxu0 0
      %2270 = vmatprep.subr.bf16.mxu0 0
      %2271 = vmatpush1.bf16.msra.mxu0 0
      %2272 = vmatprep.subr.bf16.mxu0 0
      %2273 = vmatpush1.bf16.msra.mxu0 0
      %2274 = vmatprep.subr.bf16.mxu0 0
      %2275 = vmatpush1.bf16.msra.mxu0 0
      %2276 = vmatprep.subr.bf16.mxu0 0
      %2277 = vmatpush1.bf16.msra.mxu0 0
      %2278 = vmatprep.subr.bf16.mxu0 0
      %2279 = vmatpush1.bf16.msra.mxu0 0
      %2280 = vmatprep.subr.bf16.mxu0 0
      %2281 = vmatpush1.bf16.msra.mxu0 0
      %2282 = vmatprep.subr.bf16.mxu0 0
      %2283 = vmatpush1.bf16.msra.mxu0 0
      %2284 = vmatprep.subr.bf16.mxu0 0
      %2285 = vmatpush1.bf16.msra.mxu0 0
      %2286 = vmatprep.subr.bf16.mxu0 0
      %2287 = vmatpush1.bf16.msra.mxu0 0
      %2288 = vmatprep.subr.bf16.mxu0 0
      %2289 = vmatpush1.bf16.msra.mxu0 0
      %2290 = vmatprep.subr.bf16.mxu0 0
      %2291 = vmatpush1.bf16.msra.mxu0 0
      %2292 = vmatprep.mubr.bf16.mxu0 0
      %2293 = vmatmul.mubr.bf16.gmra.mrb[0].mxu0 %v2204
      %v2294 = vpop.f32.mrb[0].mxu0
      %v2295 = vadd.f32 %v2183, %v2294
      %v2296 = vpop.f32.mrb[0].mxu0
      %v2297 = vpop.f32.mrb[0].mxu0
      %v2298 = vadd.f32 %v2188, %v2297
      %v2299 = vpop.f32.mrb[0].mxu0
      %2300 = vmatprep.mubr.bf16.mxu0 0
      %2301 = vmatmul.mubr.bf16.gmra.mrb[0].mxu0 %v2207
      %v2302 = vpop.f32.mrb[0].mxu0
      %v2303 = vadd.f32 %v2193, %v2302
      %v2304 = vpop.f32.mrb[0].mxu0
      %v2305 = vpop.f32.mrb[0].mxu0
      %v2306 = vpop.f32.mrb[0].mxu0
      %2307 = vdwg.mxu0
      %2308 = vst [vmem:[%s332] sm:$0xff] %v2244
      %2309 = vst [vmem:[%s332 + $0x8] sm:$0xff] %v2246
      %vm2310 = vcmask 523264
      %2311 = vst.msk [vmem:[%s332 + $0x10] sm:$0xff] %vm2310, %v2295
      %2312 = vst [vmem:[%s332 + $0x18] sm:$0xff] %v2248
      %2313 = vst [vmem:[%s332 + $0x20] sm:$0xff] %v2250
      %2314 = vst.msk [vmem:[%s332 + $0x28] sm:$0xff] %vm2310, %v2298
      %2315 = vst [vmem:[%s332 + $0x30] sm:$0xff] %v2254
      %2316 = vst [vmem:[%s332 + $0x38] sm:$0xff] %v2256
      %2317 = vst.msk [vmem:[%s332 + $0x40] sm:$0xff] %vm2310, %v2303
      %p2318 = scmp.lt.s32.totalorder %s20, 1
      %s2319 = scalar_select %p2318, %s20, 1
      %s2320 = smul.addr %s2319, 9
      %s2321 = smul.addr %s2320, 8
      %s2322 = scalar_lea.vmem %s9, %s2321
      // Predicated region
      $region64: #{resnet_con_forward.1} parent=55 // pred_check
        %p2323 = pneg %p232
      $region65: #{resnet_con_forward.1} parent=55 // pred_check_branch
        %2325 = sbr.rel (%p2323) target = $region67
      $region66: #{resnet_con_forward.1} parent=55 // pred_region
        _
      $region67: #{resnet_con_forward.1} parent=55 // pred_fallthru
        _
    $region56: #{resnet_con_forward.1} parent=5 // pred_fallthru
      _
    %p2326 = scmp.le.s32.totalorder 2, %s15
    // Predicated region
    $region68: #{resnet_con_forward.1} parent=5 // pred_check
      %p2327 = pneg %p2326
    $region69: #{resnet_con_forward.1} parent=5 // pred_check_branch
      %2329 = sbr.rel (%p2327) target = $region71
    $region70: #{resnet_con_forward.1} parent=5 // pred_region
      %s2330 = ssub.s32 %s15, 2
      // Predicated region
      $region72: #{resnet_con_forward.1} parent=70 // pred_check
        %p2331 = pneg %p238
      $region73: #{resnet_con_forward.1} parent=70 // pred_check_branch
        %2333 = sbr.rel (%p2331) target = $region75
      $region74: #{resnet_con_forward.1} parent=70 // pred_region
        %p2334 = scmp.lt.s32.totalorder %s21, 1
        %s2335 = scalar_select %p2334, %s21, 1
        %s2336 = smul.addr %s2335, 9
        %s2337 = smul.addr %s2336, 8
        %s2338 = scalar_lea.vmem %s9, %s2337
      $region75: #{resnet_con_forward.1} parent=70 // pred_fallthru
        _
    $region71: #{resnet_con_forward.1} parent=5 // pred_fallthru
      _
  $region6: #{resnet_con_forward.1} parent=0 // loop_footer
    %s19 = sadd.s32 1, %s15
  $region7: #{resnet_con_forward.1} parent=0 // loop_footer_branch
    %14 = sbr.rel target = $region3
  $region8: #{resnet_con_forward.1} parent=0 // loop_exit
    _

</llo_original>
